<compile_context>
chip_gen: v6e
topology: v6e:2x2x1
jax: 0.10.0
libtpu: 0.0.40
codegen_flags: <defaults>
</compile_context>

<pallas_src>
import jax
import jax.numpy as jnp
import numpy as np
from jax.experimental import pallas as pl
from jax.experimental.pallas import tpu as pltpu


# ----------------------------------------------------------------------------
# Model hyper-parameters (small, consistent with the module's __init__).
# ----------------------------------------------------------------------------
B            = 8     # batch for the demo
INPUT_DIM1   = 16    # hypernet input dim (x)
INPUT_DIM2   = 4     # target-net input dim (y)
DEPTH_F      = 3     # depth of netF
HIDDEN_F     = 32    # hidden width of netF
DEPTH_G      = 3     # depth of generated target net
HIDDEN_G     = 8     # hidden width of generated target net
BOTTLENECK   = 32    # bottleneck_dim
OUTPUT_DIM   = 1     # output_dim

# total number of generated target-net weights per sample
W_TOTAL = INPUT_DIM2 * HIDDEN_G + (DEPTH_G - 2) * HIDDEN_G ** 2 + HIDDEN_G * OUTPUT_DIM

W_PAD   = 128              # lane-dense feature width used inside the kernel
ONE_IDX = W_PAD - 1        # lane carrying the constant 1 (bias fold for layers 1..N-1)
XW      = 32               # augmented x width: [x(16) | 1 | zeros], multiple of 8
YW      = 8                # padded y width:    [y(4)  | zeros],     multiple of 8
ONE_COL = INPUT_DIM1       # column of x_aug that carries the constant 1

assert W_TOTAL <= W_PAD
assert HIDDEN_F < ONE_IDX and BOTTLENECK < ONE_IDX and W_TOTAL < W_PAD


def netf_layer_dims():
    """Reproduce the layer construction logic of Hypernet.__init__ (netF)."""
    dims = [(INPUT_DIM1, HIDDEN_F)]                 # Linear + ReLU
    for i in range(DEPTH_F - 2):
        dims.append((HIDDEN_F, HIDDEN_F))           # Linear + ReLU
        if i == DEPTH_F - 3:
            dims.append((HIDDEN_F, BOTTLENECK))     # Linear + ReLU
    dims.append((BOTTLENECK, W_TOTAL))              # final Linear (no ReLU)
    return dims


N_LAYERS = len(netf_layer_dims())

# Indices into the packed (NCONST, 128, 128) constant buffer.
IDX_S1 = N_LAYERS - 1                       # sum-matrix of generated layer 1
IDX_GH = N_LAYERS                           # first hidden-layer T (then S, T, S, ...)
IDX_TF = N_LAYERS + 2 * (DEPTH_G - 2)       # tile-matrix of the final generated layer
IDX_SF = IDX_TF + 1                         # sum-matrix of the final generated layer
NCONST = IDX_SF + 1


# ----------------------------------------------------------------------------
# Pallas kernel: per grid step, one (BB, *) batch block.
# ----------------------------------------------------------------------------
def hypernet_kernel(x_ref, y_ref, w0_ref, t1_ref, c_ref, out_ref):
    """x_ref : (BB, XW)   augmented input  [x | 1 | 0].
       y_ref : (BB, YW)   zero-padded target-net input.
       w0_ref: (XW, 128)  packed netF layer-0 weight (bias + ones-carry folded).
       t1_ref: (YW, 128)  tile matrix for generated layer 1.
       c_ref : (NCONST, 128, 128) packed netF layers 1.. + T/S selection mats.
       out_ref: (BB, 128) lane-dense output (only lane 0 meaningful).
    """
    f32 = jnp.float32

    # ---- netF: every layer is a single MXU matmul (bias folded via ones lane)
    h = jnp.dot(x_ref[...], w0_ref[...], preferred_element_type=f32)
    h = jnp.maximum(h, 0.0)                       # ReLU after layer 0 (1-lane stays 1)
    for i in range(N_LAYERS - 1):                 # netF layers 1 .. N_LAYERS-1
        h = jnp.dot(h, c_ref[i], preferred_element_type=f32)
        if i < N_LAYERS - 2:
            h = jnp.maximum(h, 0.0)               # no ReLU after the final layer
    weights = h          # (BB, 128): lanes [0, W_TOTAL) are the generated weights

    # ---- generated layer 1: ReLU(bmm(W1, y)) as tile(MXU) * (VPU) * sum(MXU)
    tiled = jnp.dot(y_ref[...], t1_ref[...], preferred_element_type=f32)   # (BB,128)
    out = jnp.dot(weights * tiled, c_ref[IDX_S1], preferred_element_type=f32)
    out = jnp.maximum(out, 0.0)                   # (BB,128), lanes >= HIDDEN_G are 0

    # ---- generated hidden layers: bmm(Wk, out), no activation
    for k in range(DEPTH_G - 2):
        tiled = jnp.dot(out, c_ref[IDX_GH + 2 * k], preferred_element_type=f32)
        out = jnp.dot(weights * tiled, c_ref[IDX_GH + 2 * k + 1],
                      preferred_element_type=f32)

    # ---- generated output layer: bmm(W_last, out); lane-dense (BB,128) store
    tiled = jnp.dot(out, c_ref[IDX_TF], preferred_element_type=f32)
    out_ref[...] = jnp.dot(weights * tiled, c_ref[IDX_SF],
                           preferred_element_type=f32)


# ----------------------------------------------------------------------------
# Host-side constant packing (done once; everything is VMEM-resident).
# ----------------------------------------------------------------------------
def _tile_mat(base, n_rows, n_cols):
    """T: (128,128). (vec @ T)[c] = vec[(c-base) % n_cols] for c in the span."""
    T = np.zeros((W_PAD, W_PAD), np.float32)
    for c in range(base, base + n_rows * n_cols):
        T[(c - base) % n_cols, c] = 1.0
    return T


def _sum_mat(base, n_rows, n_cols):
    """S: (128,128). (z @ S)[r] = sum of z over lanes with (lane-base)//n_cols == r."""
    S = np.zeros((W_PAD, W_PAD), np.float32)
    for r in range(base, base + n_rows * n_cols):
        S[r, (r - base) // n_cols] = 1.0
    return S


def pack_w0(params):
    """netF layer 0 as (XW,128): rows[0:16]=W0, row ONE_COL = [b0 | ... | 1@127]."""
    W0, b0 = params[0]
    w0 = np.zeros((XW, W_PAD), np.float32)
    w0[:INPUT_DIM1, :HIDDEN_F] = np.asarray(W0)
    w0[ONE_COL, :HIDDEN_F] = np.asarray(b0)
    w0[ONE_COL, ONE_IDX] = 1.0                   # ones-lane carry for later bias folds
    return jnp.asarray(w0)


def pack_t1():
    """Tile matrix for generated layer 1 against the 8-lane padded y."""
    t1 = np.zeros((YW, W_PAD), np.float32)
    for c in range(INPUT_DIM2 * HIDDEN_G):
        t1[c % INPUT_DIM2, c] = 1.0
    return jnp.asarray(t1)


def pack_consts(params):
    """(NCONST,128,128): netF layers 1.. (bias row + ones carry) then T/S mats."""
    mats = []
    for i in range(1, N_LAYERS):
        W, b = params[i]
        fi, fo = W.shape
        m = np.zeros((W_PAD, W_PAD), np.float32)
        m[:fi, :fo] = np.asarray(W)
        m[ONE_IDX, :fo] = np.asarray(b)
        if i < N_LAYERS - 1:
            m[ONE_IDX, ONE_IDX] = 1.0            # carry the 1 through ReLU
        mats.append(m)

    l = INPUT_DIM2 * HIDDEN_G
    mats.append(_sum_mat(0, HIDDEN_G, INPUT_DIM2))               # S1
    for k in range(DEPTH_G - 2):
        base = l + k * HIDDEN_G * HIDDEN_G
        mats.append(_tile_mat(base, HIDDEN_G, HIDDEN_G))         # T_hidden_k
        mats.append(_sum_mat(base, HIDDEN_G, HIDDEN_G))          # S_hidden_k
    base2 = l + (DEPTH_G - 2) * HIDDEN_G * HIDDEN_G
    mats.append(_tile_mat(base2, OUTPUT_DIM, HIDDEN_G))          # T_final
    mats.append(_sum_mat(base2, OUTPUT_DIM, HIDDEN_G))           # S_final
    assert len(mats) == NCONST
    return jnp.asarray(np.stack(mats))


# ----------------------------------------------------------------------------
# Wrapper: batch padding + pallas_call.
# ----------------------------------------------------------------------------
def _pick_block_rows(bt):
    """>=128 rows/step; >=2 grid steps at large batch (v7x megacore); cap 512."""
    if bt <= 256:
        return 128
    return max(128, min(512, (bt // 2 // 128) * 128))


def hypernet_forward(x, y, w0, t1, consts, *, block_rows=None):
    """x: (bt, INPUT_DIM1), y: (bt, INPUT_DIM2) -> (bt, OUTPUT_DIM)."""
    bt = x.shape[0]
    bb = block_rows if block_rows is not None else _pick_block_rows(bt)
    n_steps = pl.cdiv(bt, bb)
    bt_pad = n_steps * bb                        # batch tail handled by padding

    # Small lane-count input slabs (no 128-lane wrapper padding).
    x_aug = jnp.zeros((bt_pad, XW), jnp.float32)
    x_aug = x_aug.at[:bt, :INPUT_DIM1].set(x.astype(jnp.float32))
    x_aug = x_aug.at[:bt, ONE_COL].set(1.0)      # constant-1 column (bias fold)
    y_pad = jnp.zeros((bt_pad, YW), jnp.float32)
    y_pad = y_pad.at[:bt, :INPUT_DIM2].set(y.astype(jnp.float32))

    out = pl.pallas_call(
        hypernet_kernel,
        out_shape=jax.ShapeDtypeStruct((bt_pad, W_PAD), jnp.float32),
        grid_spec=pltpu.PrefetchScalarGridSpec(
            num_scalar_prefetch=0,
            grid=(n_steps,),
            in_specs=[
                pl.BlockSpec((bb, XW), lambda i: (i, 0)),
                pl.BlockSpec((bb, YW), lambda i: (i, 0)),
                # constants: same block every step -> stay VMEM-resident
                pl.BlockSpec((XW, W_PAD), lambda i: (0, 0)),
                pl.BlockSpec((YW, W_PAD), lambda i: (0, 0)),
                pl.BlockSpec((NCONST, W_PAD, W_PAD), lambda i: (0, 0, 0)),
            ],
            # lane-dense output block; only lane 0 is meaningful
            out_specs=pl.BlockSpec((bb, W_PAD), lambda i: (i, 0)),
        ),
        compiler_params=pltpu.CompilerParams(
            dimension_semantics=("parallel",)),
    )(x_aug, y_pad, w0, t1, consts)

    return out[:bt, :OUTPUT_DIM]


# ----------------------------------------------------------------------------
# Pure-JAX reference (mirrors PyTorch forward exactly) for correctness check.
# ----------------------------------------------------------------------------
def hypernet_reference(x, y, params):
    h = x
    for i, (W, b) in enumerate(params):
        h = h @ W + b
        if i < len(params) - 1:
            h = jnp.maximum(h, 0.0)
    weights = h
    l = INPUT_DIM2 * HIDDEN_G
    w1 = weights[:, :l].reshape(-1, HIDDEN_G, INPUT_DIM2)
    out = jnp.maximum(jnp.einsum('bhd,bd->bh', w1, y), 0.0)
    for k in range(DEPTH_G - 2):
        base = l + HIDDEN_G * HIDDEN_G * k
        wl = weights[:, base:base + HIDDEN_G * HIDDEN_G].reshape(-1, HIDDEN_G, HIDDEN_G)
        out = jnp.einsum('bij,bj->bi', wl, out)
    base2 = l + HIDDEN_G * HIDDEN_G * (DEPTH_G - 2)
    wl2 = weights[:, base2:base2 + OUTPUT_DIM * HIDDEN_G].reshape(-1, OUTPUT_DIM, HIDDEN_G)
    return jnp.einsum('boj,bj->bo', wl2, out)


# ----------------------------------------------------------------------------
# Deterministic parameter init (mimics nn.Linear default uniform init).
# ----------------------------------------------------------------------------
def init_params(key):
    params = []
    for (fan_in, fan_out) in netf_layer_dims():
        key, kw, kb = jax.random.split(key, 3)
        bound = 1.0 / np.sqrt(fan_in)
        W = jax.random.uniform(kw, (fan_in, fan_out), jnp.float32, -bound, bound)
        b = jax.random.uniform(kb, (fan_out,), jnp.float32, -bound, bound)
        params.append((W, b))
    return params


if __name__ == "__main__":
    key = jax.random.PRNGKey(0)
    key, kx, ky, kp = jax.random.split(key, 4)

    x = jax.random.normal(kx, (B, INPUT_DIM1), jnp.float32)
    y = jax.random.normal(ky, (B, INPUT_DIM2), jnp.float32)
    params = init_params(kp)

    w0 = pack_w0(params)
    t1 = pack_t1()
    consts = pack_consts(params)

    out = hypernet_forward(x, y, w0, t1, consts)
    out = jax.block_until_ready(out)

    ref = jax.block_until_ready(hypernet_reference(x, y, params))
    np.testing.assert_allclose(np.asarray(out), np.asarray(ref), rtol=1e-4, atol=1e-4)

    print("KERNEL_OK")
</pallas_src>

<mosaic_0001>
module attributes {stable_mosaic.version = 11 : i64} {
  func.func @hypernet_kernel(%arg0: i32, %arg1: memref<128x32xf32, #tpu.memory_space<vmem>>, %arg2: memref<128x8xf32, #tpu.memory_space<vmem>>, %arg3: memref<32x128xf32, #tpu.memory_space<vmem>>, %arg4: memref<8x128xf32, #tpu.memory_space<vmem>>, %arg5: memref<8x128x128xf32, #tpu.memory_space<vmem>>, %arg6: memref<128x128xf32, #tpu.memory_space<vmem>>) attributes {dimension_semantics = [#tpu.dimension_semantics<parallel>], iteration_bounds = array<i64: 1>, scalar_prefetch = 0 : i64, scratch_operands = 0 : i64, tpu.core_type = #tpu.core_type<tc>, window_params = [{transform_indices = @transform_0, window_bounds = array<i64: 128, 32>}, {transform_indices = @transform_1, window_bounds = array<i64: 128, 8>}, {pipeline_mode = #tpu.pipeline_mode<synchronous>, transform_indices = @transform_2, window_bounds = array<i64: 32, 128>}, {pipeline_mode = #tpu.pipeline_mode<synchronous>, transform_indices = @transform_3, window_bounds = array<i64: 8, 128>}, {pipeline_mode = #tpu.pipeline_mode<synchronous>, transform_indices = @transform_4, window_bounds = array<i64: 8, 128, 128>}, {transform_indices = @transform_5, window_bounds = array<i64: 128, 128>}]} {
    %c0 = arith.constant 0 : index
    %c0_0 = arith.constant 0 : index
    %0 = vector.load %arg1[%c0, %c0_0] : memref<128x32xf32, #tpu.memory_space<vmem>>, vector<128x32xf32>
    %c0_1 = arith.constant 0 : index
    %c0_2 = arith.constant 0 : index
    %1 = vector.load %arg3[%c0_1, %c0_2] : memref<32x128xf32, #tpu.memory_space<vmem>>, vector<32x128xf32>
    %cst = arith.constant dense<0.000000e+00> : vector<128x128xf32>
    %2 = tpu.matmul %0, %1, %cst {dimension_numbers = #tpu.dot_dimension_numbers<[1], [0], [0], [1], [0, 0, 1, 1], [], []>} : vector<128x32xf32>, vector<32x128xf32>, vector<128x128xf32> -> vector<128x128xf32>
    %cst_3 = arith.constant 0.000000e+00 : f32
    %3 = vector.broadcast %cst_3 : f32 to vector<128x128xf32>
    %4 = arith.maximumf %2, %3 : vector<128x128xf32>
    %c0_4 = arith.constant 0 : index
    %c0_5 = arith.constant 0 : index
    %c0_6 = arith.constant 0 : index
    %5 = vector.load %arg5[%c0_4, %c0_5, %c0_6] : memref<8x128x128xf32, #tpu.memory_space<vmem>>, vector<1x128x128xf32>
    %6 = vector.shape_cast %5 : vector<1x128x128xf32> to vector<128x128xf32>
    %cst_7 = arith.constant dense<0.000000e+00> : vector<128x128xf32>
    %7 = tpu.matmul %4, %6, %cst_7 {dimension_numbers = #tpu.dot_dimension_numbers<[1], [0], [0], [1], [0, 0, 1, 1], [], []>} : vector<128x128xf32>, vector<128x128xf32>, vector<128x128xf32> -> vector<128x128xf32>
    %cst_8 = arith.constant 0.000000e+00 : f32
    %8 = vector.broadcast %cst_8 : f32 to vector<128x128xf32>
    %9 = arith.maximumf %7, %8 : vector<128x128xf32>
    %c1 = arith.constant 1 : index
    %c0_9 = arith.constant 0 : index
    %c0_10 = arith.constant 0 : index
    %10 = vector.load %arg5[%c1, %c0_9, %c0_10] : memref<8x128x128xf32, #tpu.memory_space<vmem>>, vector<1x128x128xf32>
    %11 = vector.shape_cast %10 : vector<1x128x128xf32> to vector<128x128xf32>
    %cst_11 = arith.constant dense<0.000000e+00> : vector<128x128xf32>
    %12 = tpu.matmul %9, %11, %cst_11 {dimension_numbers = #tpu.dot_dimension_numbers<[1], [0], [0], [1], [0, 0, 1, 1], [], []>} : vector<128x128xf32>, vector<128x128xf32>, vector<128x128xf32> -> vector<128x128xf32>
    %cst_12 = arith.constant 0.000000e+00 : f32
    %13 = vector.broadcast %cst_12 : f32 to vector<128x128xf32>
    %14 = arith.maximumf %12, %13 : vector<128x128xf32>
    %c2 = arith.constant 2 : index
    %c0_13 = arith.constant 0 : index
    %c0_14 = arith.constant 0 : index
    %15 = vector.load %arg5[%c2, %c0_13, %c0_14] : memref<8x128x128xf32, #tpu.memory_space<vmem>>, vector<1x128x128xf32>
    %16 = vector.shape_cast %15 : vector<1x128x128xf32> to vector<128x128xf32>
    %cst_15 = arith.constant dense<0.000000e+00> : vector<128x128xf32>
    %17 = tpu.matmul %14, %16, %cst_15 {dimension_numbers = #tpu.dot_dimension_numbers<[1], [0], [0], [1], [0, 0, 1, 1], [], []>} : vector<128x128xf32>, vector<128x128xf32>, vector<128x128xf32> -> vector<128x128xf32>
    %c0_16 = arith.constant 0 : index
    %c0_17 = arith.constant 0 : index
    %18 = vector.load %arg2[%c0_16, %c0_17] : memref<128x8xf32, #tpu.memory_space<vmem>>, vector<128x8xf32>
    %c0_18 = arith.constant 0 : index
    %c0_19 = arith.constant 0 : index
    %19 = vector.load %arg4[%c0_18, %c0_19] : memref<8x128xf32, #tpu.memory_space<vmem>>, vector<8x128xf32>
    %cst_20 = arith.constant dense<0.000000e+00> : vector<128x128xf32>
    %20 = tpu.matmul %18, %19, %cst_20 {dimension_numbers = #tpu.dot_dimension_numbers<[1], [0], [0], [1], [0, 0, 1, 1], [], []>} : vector<128x8xf32>, vector<8x128xf32>, vector<128x128xf32> -> vector<128x128xf32>
    %21 = arith.mulf %17, %20 : vector<128x128xf32>
    %c3 = arith.constant 3 : index
    %c0_21 = arith.constant 0 : index
    %c0_22 = arith.constant 0 : index
    %22 = vector.load %arg5[%c3, %c0_21, %c0_22] : memref<8x128x128xf32, #tpu.memory_space<vmem>>, vector<1x128x128xf32>
    %23 = vector.shape_cast %22 : vector<1x128x128xf32> to vector<128x128xf32>
    %cst_23 = arith.constant dense<0.000000e+00> : vector<128x128xf32>
    %24 = tpu.matmul %21, %23, %cst_23 {dimension_numbers = #tpu.dot_dimension_numbers<[1], [0], [0], [1], [0, 0, 1, 1], [], []>} : vector<128x128xf32>, vector<128x128xf32>, vector<128x128xf32> -> vector<128x128xf32>
    %cst_24 = arith.constant 0.000000e+00 : f32
    %25 = vector.broadcast %cst_24 : f32 to vector<128x128xf32>
    %26 = arith.maximumf %24, %25 : vector<128x128xf32>
    %c4 = arith.constant 4 : index
    %c0_25 = arith.constant 0 : index
    %c0_26 = arith.constant 0 : index
    %27 = vector.load %arg5[%c4, %c0_25, %c0_26] : memref<8x128x128xf32, #tpu.memory_space<vmem>>, vector<1x128x128xf32>
    %28 = vector.shape_cast %27 : vector<1x128x128xf32> to vector<128x128xf32>
    %cst_27 = arith.constant dense<0.000000e+00> : vector<128x128xf32>
    %29 = tpu.matmul %26, %28, %cst_27 {dimension_numbers = #tpu.dot_dimension_numbers<[1], [0], [0], [1], [0, 0, 1, 1], [], []>} : vector<128x128xf32>, vector<128x128xf32>, vector<128x128xf32> -> vector<128x128xf32>
    %30 = arith.mulf %17, %29 : vector<128x128xf32>
    %c5 = arith.constant 5 : index
    %c0_28 = arith.constant 0 : index
    %c0_29 = arith.constant 0 : index
    %31 = vector.load %arg5[%c5, %c0_28, %c0_29] : memref<8x128x128xf32, #tpu.memory_space<vmem>>, vector<1x128x128xf32>
    %32 = vector.shape_cast %31 : vector<1x128x128xf32> to vector<128x128xf32>
    %cst_30 = arith.constant dense<0.000000e+00> : vector<128x128xf32>
    %33 = tpu.matmul %30, %32, %cst_30 {dimension_numbers = #tpu.dot_dimension_numbers<[1], [0], [0], [1], [0, 0, 1, 1], [], []>} : vector<128x128xf32>, vector<128x128xf32>, vector<128x128xf32> -> vector<128x128xf32>
    %c6 = arith.constant 6 : index
    %c0_31 = arith.constant 0 : index
    %c0_32 = arith.constant 0 : index
    %34 = vector.load %arg5[%c6, %c0_31, %c0_32] : memref<8x128x128xf32, #tpu.memory_space<vmem>>, vector<1x128x128xf32>
    %35 = vector.shape_cast %34 : vector<1x128x128xf32> to vector<128x128xf32>
    %cst_33 = arith.constant dense<0.000000e+00> : vector<128x128xf32>
    %36 = tpu.matmul %33, %35, %cst_33 {dimension_numbers = #tpu.dot_dimension_numbers<[1], [0], [0], [1], [0, 0, 1, 1], [], []>} : vector<128x128xf32>, vector<128x128xf32>, vector<128x128xf32> -> vector<128x128xf32>
    %37 = arith.mulf %17, %36 : vector<128x128xf32>
    %c7 = arith.constant 7 : index
    %c0_34 = arith.constant 0 : index
    %c0_35 = arith.constant 0 : index
    %38 = vector.load %arg5[%c7, %c0_34, %c0_35] : memref<8x128x128xf32, #tpu.memory_space<vmem>>, vector<1x128x128xf32>
    %39 = vector.shape_cast %38 : vector<1x128x128xf32> to vector<128x128xf32>
    %cst_36 = arith.constant dense<0.000000e+00> : vector<128x128xf32>
    %40 = tpu.matmul %37, %39, %cst_36 {dimension_numbers = #tpu.dot_dimension_numbers<[1], [0], [0], [1], [0, 0, 1, 1], [], []>} : vector<128x128xf32>, vector<128x128xf32>, vector<128x128xf32> -> vector<128x128xf32>
    %c0_37 = arith.constant 0 : index
    %c0_38 = arith.constant 0 : index
    %41 = vector.load %arg6[%c0_37, %c0_38] : memref<128x128xf32, #tpu.memory_space<vmem>>, vector<128x128xf32>
    tpu.vector_store %arg6[%c0_37, %c0_38], %40 {strides = array<i32>} : memref<128x128xf32, #tpu.memory_space<vmem>>, vector<128x128xf32>,
    return
  }
  func.func @transform_0(%arg0: i32) -> (i32, i32) {
    %c0_i32 = arith.constant 0 : i32
    %c0_i32_0 = arith.constant 0 : i32
    return %arg0, %c0_i32 : i32, i32
  }
  func.func @transform_1(%arg0: i32) -> (i32, i32) {
    %c0_i32 = arith.constant 0 : i32
    %c0_i32_0 = arith.constant 0 : i32
    return %arg0, %c0_i32 : i32, i32
  }
  func.func @transform_2(%arg0: i32) -> (i32, i32) {
    %c0_i32 = arith.constant 0 : i32
    %c0_i32_0 = arith.constant 0 : i32
    %c0_i32_1 = arith.constant 0 : i32
    return %c0_i32, %c0_i32_0 : i32, i32
  }
  func.func @transform_3(%arg0: i32) -> (i32, i32) {
    %c0_i32 = arith.constant 0 : i32
    %c0_i32_0 = arith.constant 0 : i32
    %c0_i32_1 = arith.constant 0 : i32
    return %c0_i32, %c0_i32_0 : i32, i32
  }
  func.func @transform_4(%arg0: i32) -> (i32, i32, i32) {
    %c0_i32 = arith.constant 0 : i32
    %c0_i32_0 = arith.constant 0 : i32
    %c0_i32_1 = arith.constant 0 : i32
    %c0_i32_2 = arith.constant 0 : i32
    return %c0_i32, %c0_i32_0, %c0_i32_1 : i32, i32, i32
  }
  func.func @transform_5(%arg0: i32) -> (i32, i32) {
    %c0_i32 = arith.constant 0 : i32
    %c0_i32_0 = arith.constant 0 : i32
    return %arg0, %c0_i32 : i32, i32
  }
}

</mosaic_0001>

<llo_original>
// kernel: tpu_custom_call.1
$region0: #{tpu_custom_call.1}
  #allocation0 [shape = 'u32[]', space=smem, size = 0x4, offset = 0x4, fixed_abs, tag = 'smem constant byte address 0x4 - core index']
  #allocation1 [shape = 'u32[144,128]{1,0:T(1,128)}', space=vmem, size = 0x12000, scoped, tag = 'internal scratch']
  %s0 = inlined_call_operand.vmem [shape: f32[128,32], index: 0, kind: input, shape index: {}]
  %s1 = inlined_call_operand.vmem [shape: f32[128,8], index: 1, kind: input, shape index: {}]
  %s2 = inlined_call_operand.vmem [shape: f32[32,128], index: 2, kind: input, shape index: {}]
  %s3 = inlined_call_operand.vmem [shape: f32[8,128], index: 3, kind: input, shape index: {}]
  %s4 = inlined_call_operand.hbm [shape: f32[8,128,128], index: 4, kind: input, shape index: {}]
  %s5 = inlined_call_operand.hbm [shape: f32[128,128], index: 5, kind: output, shape index: {}]
  %s6 = sld [smem:[#allocation0]]
  $region34: #{tpu_custom_call.1} parent=0
    _
  %s8 = ssub.s32 1, %s6
  %s9 = scalar_select 0, %s8, %s6
  $region1: #{tpu_custom_call.1} parent=0
    #allocation2 [shape = 'u8[524288]{0}', space=vmem, size = 0x80000, scoped, tag = 'input window, operand 4, single buffered']
    #allocation3 [shape = 's32[1]{0}', space=sflag, size = 0x4, scoped, tag = 'scoped memory for tpu_custom_call.1']
    #allocation4 [shape = 's32[1]{0}', space=sflag, size = 0x4, scoped, tag = 'scoped memory for tpu_custom_call.1']
    #allocation5 [shape = 'u8[65536]{0}', space=vmem, size = 0x10000, scoped, tag = 'output window, operand 0, single buffered']
    %10 = vsyncpa [#allocation3], 0
    %11 = vsyncpa [#allocation4], 0
    // Predicated region
    $region2: #{tpu_custom_call.1} parent=1 // pred_check
      _
    $region3: #{tpu_custom_call.1} parent=1 // pred_check_branch
      %13 = sbr.rel (0) target = $region5
    $region4: #{tpu_custom_call.1} parent=1 // pred_region
      _
    $region5: #{tpu_custom_call.1} parent=1 // pred_fallthru
      _
    // Predicated region
    $region6: #{tpu_custom_call.1} parent=1 // pred_check
      _
    $region7: #{tpu_custom_call.1} parent=1 // pred_check_branch
      %15 = sbr.rel (0) target = $region9
    $region8: #{tpu_custom_call.1} parent=1 // pred_region
      _
    $region9: #{tpu_custom_call.1} parent=1 // pred_fallthru
      _
    // Predicated region
    $region10: #{tpu_custom_call.1} parent=1 // pred_check
      _
    $region11: #{tpu_custom_call.1} parent=1 // pred_check_branch
      %17 = sbr.rel (0) target = $region13
    $region12: #{tpu_custom_call.1} parent=1 // pred_region
      _
    $region13: #{tpu_custom_call.1} parent=1 // pred_fallthru
      _
    // Predicated region
    $region14: #{tpu_custom_call.1} parent=1 // pred_check
      _
    $region15: #{tpu_custom_call.1} parent=1 // pred_check_branch
      %19 = sbr.rel (0) target = $region17
    $region16: #{tpu_custom_call.1} parent=1 // pred_region
      _
    $region17: #{tpu_custom_call.1} parent=1 // pred_fallthru
      _
    // Predicated region
    $region18: #{tpu_custom_call.1} parent=1 // pred_check
      _
    $region19: #{tpu_custom_call.1} parent=1 // pred_check_branch
      %21 = sbr.rel (0) target = $region21
    $region20: #{tpu_custom_call.1} parent=1 // pred_region
      %s23 = ssub.s32 16384, 16384
      %24 = vsyncadd [#allocation3], %s23
      %s25 = sshll.u32 [#allocation2], 4
      %s26 = int_to_ptr.vmem [resolvable:$true] %s25
      %31 = dma.hbm_to_vmem [thread:$0]  %s4, 16384, %s26, [#allocation3], 128, 128, 8
    $region21: #{tpu_custom_call.1} parent=1 // pred_fallthru
      _
    // Predicated region
    $region22: #{tpu_custom_call.1} parent=1 // pred_check
      _
    $region23: #{tpu_custom_call.1} parent=1 // pred_check_branch
      %33 = sbr.rel (0) target = $region25
    $region24: #{tpu_custom_call.1} parent=1 // pred_region
      %34 = dma.done [#allocation3], 16384
    $region25: #{tpu_custom_call.1} parent=1 // pred_fallthru
      _
    %v35 = vld [vmem:[%s0] sm:$0xff]
    %v36 = vld [vmem:[%s0 + $0x8] sm:$0xff]
    %v37 = vld [vmem:[%s0 + $0x10] sm:$0xff]
    %v38 = vld [vmem:[%s0 + $0x18] sm:$0xff]
    %v39 = vld [vmem:[%s0 + $0x20] sm:$0xff]
    %v40 = vld [vmem:[%s0 + $0x28] sm:$0xff]
    %v41 = vld [vmem:[%s0 + $0x30] sm:$0xff]
    %v42 = vld [vmem:[%s0 + $0x38] sm:$0xff]
    %v43 = vld [vmem:[%s0 + $0x40] sm:$0xff]
    %v44 = vld [vmem:[%s0 + $0x48] sm:$0xff]
    %v45 = vld [vmem:[%s0 + $0x50] sm:$0xff]
    %v46 = vld [vmem:[%s0 + $0x58] sm:$0xff]
    %v47 = vld [vmem:[%s0 + $0x60] sm:$0xff]
    %v48 = vld [vmem:[%s0 + $0x68] sm:$0xff]
    %v49 = vld [vmem:[%s0 + $0x70] sm:$0xff]
    %v50 = vld [vmem:[%s0 + $0x78] sm:$0xff]
    %v51 = vld [vmem:[%s2] sm:$0xff]
    %v52 = vld [vmem:[%s2 + $0x8] sm:$0xff]
    %v53 = vld [vmem:[%s2 + $0x10] sm:$0xff]
    %v54 = vld [vmem:[%s2 + $0x18] sm:$0xff]
    %vm55 = vcmask 261120
    %v57 = vsel %vm55, %v35, 0
    %v60 = vsel %vm55, %v36, 0
    %v63 = vsel %vm55, %v37, 0
    %v66 = vsel %vm55, %v38, 0
    %v69 = vsel %vm55, %v39, 0
    %v72 = vsel %vm55, %v40, 0
    %v75 = vsel %vm55, %v41, 0
    %v78 = vsel %vm55, %v42, 0
    %v81 = vsel %vm55, %v43, 0
    %v84 = vsel %vm55, %v44, 0
    %v87 = vsel %vm55, %v45, 0
    %v90 = vsel %vm55, %v46, 0
    %v93 = vsel %vm55, %v47, 0
    %v96 = vsel %vm55, %v48, 0
    %v99 = vsel %vm55, %v49, 0
    %v102 = vsel %vm55, %v50, 0
    %104 = vmatprep.subr.mxu0 0.0
    %105 = vmatpush1.msra.mxu0 0.0
    %106 = vmatprep.subr.mxu0 0.0
    %107 = vmatpush1.msra.mxu0 0.0
    %108 = vmatprep.subr.mxu0 0.0
    %109 = vmatpush1.msra.mxu0 0.0
    %110 = vmatprep.subr.mxu0 0.0
    %111 = vmatpush1.msra.mxu0 0.0
    %112 = vmatprep.subr.mxu0 0.0
    %113 = vmatpush1.msra.mxu0 0.0
    %114 = vmatprep.subr.mxu0 0.0
    %115 = vmatpush1.msra.mxu0 0.0
    %116 = vmatprep.subr.mxu0 0.0
    %117 = vmatpush1.msra.mxu0 0.0
    %118 = vmatprep.subr.mxu0 0.0
    %119 = vmatpush1.msra.mxu0 0.0
    %120 = vmatprep.subr.mxu0 0.0
    %121 = vmatpush1.msra.mxu0 0.0
    %122 = vmatprep.subr.mxu0 0.0
    %123 = vmatpush1.msra.mxu0 0.0
    %124 = vmatprep.subr.mxu0 0.0
    %125 = vmatpush1.msra.mxu0 0.0
    %126 = vmatprep.subr.mxu0 0.0
    %127 = vmatpush1.msra.mxu0 0.0
    %128 = vmatprep.subr.mxu0 0.0
    %129 = vmatpush1.msra.mxu0 %v54
    %130 = vmatprep.subr.mxu0 0.0
    %131 = vmatpush1.msra.mxu0 %v53
    %132 = vmatprep.subr.mxu0 0.0
    %133 = vmatpush1.msra.mxu0 %v52
    %134 = vmatprep.subr.mxu0 0.0
    %135 = vmatpush1.msra.mxu0 %v51
    %136 = vmatprep.subr.mxu0 0.0
    %137 = vmatpush2.msra.mxu0 0.0
    %138 = vmatprep.subr.mxu0 0.0
    %139 = vmatpush2.msra.mxu0 0.0
    %140 = vmatprep.subr.mxu0 0.0
    %141 = vmatpush2.msra.mxu0 0.0
    %142 = vmatprep.subr.mxu0 0.0
    %143 = vmatpush2.msra.mxu0 0.0
    %144 = vmatprep.subr.mxu0 0.0
    %145 = vmatpush2.msra.mxu0 0.0
    %146 = vmatprep.subr.mxu0 0.0
    %147 = vmatpush2.msra.mxu0 0.0
    %148 = vmatprep.subr.mxu0 0.0
    %149 = vmatpush2.msra.mxu0 0.0
    %150 = vmatprep.subr.mxu0 0.0
    %151 = vmatpush2.msra.mxu0 0.0
    %152 = vmatprep.subr.mxu0 0.0
    %153 = vmatpush2.msra.mxu0 0.0
    %154 = vmatprep.subr.mxu0 0.0
    %155 = vmatpush2.msra.mxu0 0.0
    %156 = vmatprep.subr.mxu0 0.0
    %157 = vmatpush2.msra.mxu0 0.0
    %158 = vmatprep.subr.mxu0 0.0
    %159 = vmatpush2.msra.mxu0 0.0
    %160 = vmatprep.subr.mxu0 0.0
    %161 = vmatpush2.msra.mxu0 0.0
    %162 = vmatprep.subr.mxu0 0.0
    %163 = vmatpush2.msra.mxu0 0.0
    %164 = vmatprep.subr.mxu0 0.0
    %165 = vmatpush2.msra.mxu0 0.0
    %166 = vmatprep.subr.mxu0 0.0
    %167 = vmatpush2.msra.mxu0 0.0
    %168 = vmatprep.mubr.f32.mxu0 0.0
    %169 = vmatmul.mubr.f32.gmra.mxu0 %v57
    %v170 = vpop.f32.mrf.mxu0
    %v171 = vadd.f32 0.0, %v170
    %v172 = vpop.f32.mrf.mxu0
    %173 = vmatprep.mubr.f32.mxu0 0.0
    %174 = vmatmul.mubr.f32.gmra.mxu0 %v60
    %v175 = vpop.f32.mrf.mxu0
    %v176 = vadd.f32 0.0, %v175
    %v177 = vpop.f32.mrf.mxu0
    %178 = vmatprep.mubr.f32.mxu0 0.0
    %179 = vmatmul.mubr.f32.gmra.mxu0 %v63
    %v180 = vpop.f32.mrf.mxu0
    %v181 = vadd.f32 0.0, %v180
    %v182 = vpop.f32.mrf.mxu0
    %183 = vmatprep.mubr.f32.mxu0 0.0
    %184 = vmatmul.mubr.f32.gmra.mxu0 %v66
    %v185 = vpop.f32.mrf.mxu0
    %v186 = vadd.f32 0.0, %v185
    %v187 = vpop.f32.mrf.mxu0
    %188 = vmatprep.mubr.f32.mxu0 0.0
    %189 = vmatmul.mubr.f32.gmra.mxu0 %v69
    %v190 = vpop.f32.mrf.mxu0
    %v191 = vadd.f32 0.0, %v190
    %v192 = vpop.f32.mrf.mxu0
    %193 = vmatprep.mubr.f32.mxu0 0.0
    %194 = vmatmul.mubr.f32.gmra.mxu0 %v72
    %v195 = vpop.f32.mrf.mxu0
    %v196 = vadd.f32 0.0, %v195
    %v197 = vpop.f32.mrf.mxu0
    %198 = vmatprep.mubr.f32.mxu0 0.0
    %199 = vmatmul.mubr.f32.gmra.mxu0 %v75
    %v200 = vpop.f32.mrf.mxu0
    %v201 = vadd.f32 0.0, %v200
    %v202 = vpop.f32.mrf.mxu0
    %203 = vmatprep.mubr.f32.mxu0 0.0
    %204 = vmatmul.mubr.f32.gmra.mxu0 %v78
    %v205 = vpop.f32.mrf.mxu0
    %v206 = vadd.f32 0.0, %v205
    %v207 = vpop.f32.mrf.mxu0
    %208 = vmatprep.mubr.f32.mxu0 0.0
    %209 = vmatmul.mubr.f32.gmra.mxu0 %v81
    %v210 = vpop.f32.mrf.mxu0
    %v211 = vadd.f32 0.0, %v210
    %v212 = vpop.f32.mrf.mxu0
    %213 = vmatprep.mubr.f32.mxu0 0.0
    %214 = vmatmul.mubr.f32.gmra.mxu0 %v84
    %v215 = vpop.f32.mrf.mxu0
    %v216 = vadd.f32 0.0, %v215
    %v217 = vpop.f32.mrf.mxu0
    %218 = vmatprep.mubr.f32.mxu0 0.0
    %219 = vmatmul.mubr.f32.gmra.mxu0 %v87
    %v220 = vpop.f32.mrf.mxu0
    %v221 = vadd.f32 0.0, %v220
    %v222 = vpop.f32.mrf.mxu0
    %223 = vmatprep.mubr.f32.mxu0 0.0
    %224 = vmatmul.mubr.f32.gmra.mxu0 %v90
    %v225 = vpop.f32.mrf.mxu0
    %v226 = vadd.f32 0.0, %v225
    %v227 = vpop.f32.mrf.mxu0
    %228 = vmatprep.mubr.f32.mxu0 0.0
    %229 = vmatmul.mubr.f32.gmra.mxu0 %v93
    %v230 = vpop.f32.mrf.mxu0
    %v231 = vadd.f32 0.0, %v230
    %v232 = vpop.f32.mrf.mxu0
    %233 = vmatprep.mubr.f32.mxu0 0.0
    %234 = vmatmul.mubr.f32.gmra.mxu0 %v96
    %v235 = vpop.f32.mrf.mxu0
    %v236 = vadd.f32 0.0, %v235
    %v237 = vpop.f32.mrf.mxu0
    %238 = vmatprep.mubr.f32.mxu0 0.0
    %239 = vmatmul.mubr.f32.gmra.mxu0 %v99
    %v240 = vpop.f32.mrf.mxu0
    %v241 = vadd.f32 0.0, %v240
    %v242 = vpop.f32.mrf.mxu0
    %243 = vmatprep.mubr.f32.mxu0 0.0
    %244 = vmatmul.mubr.f32.gmra.mxu0 %v102
    %v245 = vpop.f32.mrf.mxu0
    %v246 = vadd.f32 0.0, %v245
    %v247 = vpop.f32.mrf.mxu0
    %248 = vdwg.mxu0
    %v249 = vmax.f32 %v171, 0.0
    %v250 = vmax.f32 %v176, 0.0
    %v251 = vmax.f32 %v181, 0.0
    %v252 = vmax.f32 %v186, 0.0
    %v253 = vmax.f32 %v191, 0.0
    %v254 = vmax.f32 %v196, 0.0
    %v255 = vmax.f32 %v201, 0.0
    %v256 = vmax.f32 %v206, 0.0
    %v257 = vmax.f32 %v211, 0.0
    %v258 = vmax.f32 %v216, 0.0
    %v259 = vmax.f32 %v221, 0.0
    %v260 = vmax.f32 %v226, 0.0
    %v261 = vmax.f32 %v231, 0.0
    %v262 = vmax.f32 %v236, 0.0
    %v263 = vmax.f32 %v241, 0.0
    %v264 = vmax.f32 %v246, 0.0
    %v265 = vld [vmem:[#allocation2] sm:$0xff]
    %v266 = vld [vmem:[#allocation2 + $0x8] sm:$0xff]
    %v267 = vld [vmem:[#allocation2 + $0x10] sm:$0xff]
    %v268 = vld [vmem:[#allocation2 + $0x18] sm:$0xff]
    %v269 = vld [vmem:[#allocation2 + $0x20] sm:$0xff]
    %v270 = vld [vmem:[#allocation2 + $0x28] sm:$0xff]
    %v271 = vld [vmem:[#allocation2 + $0x30] sm:$0xff]
    %v272 = vld [vmem:[#allocation2 + $0x38] sm:$0xff]
    %v273 = vld [vmem:[#allocation2 + $0x40] sm:$0xff]
    %v274 = vld [vmem:[#allocation2 + $0x48] sm:$0xff]
    %v275 = vld [vmem:[#allocation2 + $0x50] sm:$0xff]
    %v276 = vld [vmem:[#allocation2 + $0x58] sm:$0xff]
    %v277 = vld [vmem:[#allocation2 + $0x60] sm:$0xff]
    %v278 = vld [vmem:[#allocation2 + $0x68] sm:$0xff]
    %v279 = vld [vmem:[#allocation2 + $0x70] sm:$0xff]
    %v280 = vld [vmem:[#allocation2 + $0x78] sm:$0xff]
    %281 = vmatprep.subr.mxu0 0.0
    %282 = vmatpush1.msra.mxu0 %v280
    %283 = vmatprep.subr.mxu0 0.0
    %284 = vmatpush1.msra.mxu0 %v279
    %285 = vmatprep.subr.mxu0 0.0
    %286 = vmatpush1.msra.mxu0 %v278
    %287 = vmatprep.subr.mxu0 0.0
    %288 = vmatpush1.msra.mxu0 %v277
    %289 = vmatprep.subr.mxu0 0.0
    %290 = vmatpush1.msra.mxu0 %v276
    %291 = vmatprep.subr.mxu0 0.0
    %292 = vmatpush1.msra.mxu0 %v275
    %293 = vmatprep.subr.mxu0 0.0
    %294 = vmatpush1.msra.mxu0 %v274
    %295 = vmatprep.subr.mxu0 0.0
    %296 = vmatpush1.msra.mxu0 %v273
    %297 = vmatprep.subr.mxu0 0.0
    %298 = vmatpush1.msra.mxu0 %v272
    %299 = vmatprep.subr.mxu0 0.0
    %300 = vmatpush1.msra.mxu0 %v271
    %301 = vmatprep.subr.mxu0 0.0
    %302 = vmatpush1.msra.mxu0 %v270
    %303 = vmatprep.subr.mxu0 0.0
    %304 = vmatpush1.msra.mxu0 %v269
    %305 = vmatprep.subr.mxu0 0.0
    %306 = vmatpush1.msra.mxu0 %v268
    %307 = vmatprep.subr.mxu0 0.0
    %308 = vmatpush1.msra.mxu0 %v267
    %309 = vmatprep.subr.mxu0 0.0
    %310 = vmatpush1.msra.mxu0 %v266
    %311 = vmatprep.subr.mxu0 0.0
    %312 = vmatpush1.msra.mxu0 %v265
    %313 = vmatprep.subr.mxu0 0.0
    %314 = vmatpush2.msra.mxu0 0.0
    %315 = vmatprep.subr.mxu0 0.0
    %316 = vmatpush2.msra.mxu0 0.0
    %317 = vmatprep.subr.mxu0 0.0
    %318 = vmatpush2.msra.mxu0 0.0
    %319 = vmatprep.subr.mxu0 0.0
    %320 = vmatpush2.msra.mxu0 0.0
    %321 = vmatprep.subr.mxu0 0.0
    %322 = vmatpush2.msra.mxu0 0.0
    %323 = vmatprep.subr.mxu0 0.0
    %324 = vmatpush2.msra.mxu0 0.0
    %325 = vmatprep.subr.mxu0 0.0
    %326 = vmatpush2.msra.mxu0 0.0
    %327 = vmatprep.subr.mxu0 0.0
    %328 = vmatpush2.msra.mxu0 0.0
    %329 = vmatprep.subr.mxu0 0.0
    %330 = vmatpush2.msra.mxu0 0.0
    %331 = vmatprep.subr.mxu0 0.0
    %332 = vmatpush2.msra.mxu0 0.0
    %333 = vmatprep.subr.mxu0 0.0
    %334 = vmatpush2.msra.mxu0 0.0
    %335 = vmatprep.subr.mxu0 0.0
    %336 = vmatpush2.msra.mxu0 0.0
    %337 = vmatprep.subr.mxu0 0.0
    %338 = vmatpush2.msra.mxu0 0.0
    %339 = vmatprep.subr.mxu0 0.0
    %340 = vmatpush2.msra.mxu0 0.0
    %341 = vmatprep.subr.mxu0 0.0
    %342 = vmatpush2.msra.mxu0 0.0
    %343 = vmatprep.subr.mxu0 0.0
    %344 = vmatpush2.msra.mxu0 0.0
    %345 = vmatprep.mubr.f32.mxu0 0.0
    %346 = vmatmul.mubr.f32.gmra.mxu0 %v249
    %v347 = vpop.f32.mrf.mxu0
    %v348 = vadd.f32 0.0, %v347
    %v349 = vpop.f32.mrf.mxu0
    %350 = vmatprep.mubr.f32.mxu0 0.0
    %351 = vmatmul.mubr.f32.gmra.mxu0 %v250
    %v352 = vpop.f32.mrf.mxu0
    %v353 = vadd.f32 0.0, %v352
    %v354 = vpop.f32.mrf.mxu0
    %355 = vmatprep.mubr.f32.mxu0 0.0
    %356 = vmatmul.mubr.f32.gmra.mxu0 %v251
    %v357 = vpop.f32.mrf.mxu0
    %v358 = vadd.f32 0.0, %v357
    %v359 = vpop.f32.mrf.mxu0
    %360 = vmatprep.mubr.f32.mxu0 0.0
    %361 = vmatmul.mubr.f32.gmra.mxu0 %v252
    %v362 = vpop.f32.mrf.mxu0
    %v363 = vadd.f32 0.0, %v362
    %v364 = vpop.f32.mrf.mxu0
    %365 = vmatprep.mubr.f32.mxu0 0.0
    %366 = vmatmul.mubr.f32.gmra.mxu0 %v253
    %v367 = vpop.f32.mrf.mxu0
    %v368 = vadd.f32 0.0, %v367
    %v369 = vpop.f32.mrf.mxu0
    %370 = vmatprep.mubr.f32.mxu0 0.0
    %371 = vmatmul.mubr.f32.gmra.mxu0 %v254
    %v372 = vpop.f32.mrf.mxu0
    %v373 = vadd.f32 0.0, %v372
    %v374 = vpop.f32.mrf.mxu0
    %375 = vmatprep.mubr.f32.mxu0 0.0
    %376 = vmatmul.mubr.f32.gmra.mxu0 %v255
    %v377 = vpop.f32.mrf.mxu0
    %v378 = vadd.f32 0.0, %v377
    %v379 = vpop.f32.mrf.mxu0
    %380 = vmatprep.mubr.f32.mxu0 0.0
    %381 = vmatmul.mubr.f32.gmra.mxu0 %v256
    %v382 = vpop.f32.mrf.mxu0
    %v383 = vadd.f32 0.0, %v382
    %v384 = vpop.f32.mrf.mxu0
    %385 = vmatprep.mubr.f32.mxu0 0.0
    %386 = vmatmul.mubr.f32.gmra.mxu0 %v257
    %v387 = vpop.f32.mrf.mxu0
    %v388 = vadd.f32 0.0, %v387
    %v389 = vpop.f32.mrf.mxu0
    %390 = vmatprep.mubr.f32.mxu0 0.0
    %391 = vmatmul.mubr.f32.gmra.mxu0 %v258
    %v392 = vpop.f32.mrf.mxu0
    %v393 = vadd.f32 0.0, %v392
    %v394 = vpop.f32.mrf.mxu0
    %395 = vmatprep.mubr.f32.mxu0 0.0
    %396 = vmatmul.mubr.f32.gmra.mxu0 %v259
    %v397 = vpop.f32.mrf.mxu0
    %v398 = vadd.f32 0.0, %v397
    %v399 = vpop.f32.mrf.mxu0
    %400 = vmatprep.mubr.f32.mxu0 0.0
    %401 = vmatmul.mubr.f32.gmra.mxu0 %v260
    %v402 = vpop.f32.mrf.mxu0
    %v403 = vadd.f32 0.0, %v402
    %v404 = vpop.f32.mrf.mxu0
    %405 = vmatprep.mubr.f32.mxu0 0.0
    %406 = vmatmul.mubr.f32.gmra.mxu0 %v261
    %v407 = vpop.f32.mrf.mxu0
    %v408 = vadd.f32 0.0, %v407
    %v409 = vpop.f32.mrf.mxu0
    %410 = vmatprep.mubr.f32.mxu0 0.0
    %411 = vmatmul.mubr.f32.gmra.mxu0 %v262
    %v412 = vpop.f32.mrf.mxu0
    %v413 = vadd.f32 0.0, %v412
    %v414 = vpop.f32.mrf.mxu0
    %415 = vmatprep.mubr.f32.mxu0 0.0
    %416 = vmatmul.mubr.f32.gmra.mxu0 %v263
    %v417 = vpop.f32.mrf.mxu0
    %v418 = vadd.f32 0.0, %v417
    %v419 = vpop.f32.mrf.mxu0
    %420 = vmatprep.mubr.f32.mxu0 0.0
    %421 = vmatmul.mubr.f32.gmra.mxu0 %v264
    %v422 = vpop.f32.mrf.mxu0
    %v423 = vadd.f32 0.0, %v422
    %v424 = vpop.f32.mrf.mxu0
    %425 = vdwg.mxu0
    %v426 = vmax.f32 %v348, 0.0
    %v427 = vmax.f32 %v353, 0.0
    %v428 = vmax.f32 %v358, 0.0
    %v429 = vmax.f32 %v363, 0.0
    %v430 = vmax.f32 %v368, 0.0
    %v431 = vmax.f32 %v373, 0.0
    %v432 = vmax.f32 %v378, 0.0
    %v433 = vmax.f32 %v383, 0.0
    %v434 = vmax.f32 %v388, 0.0
    %v435 = vmax.f32 %v393, 0.0
    %v436 = vmax.f32 %v398, 0.0
    %v437 = vmax.f32 %v403, 0.0
    %v438 = vmax.f32 %v408, 0.0
    %v439 = vmax.f32 %v413, 0.0
    %v440 = vmax.f32 %v418, 0.0
    %v441 = vmax.f32 %v423, 0.0
    %s442 = scalar_lea.vmem [#allocation2], 128
    %v443 = vld [vmem:[%s442] sm:$0xff]
    %v444 = vld [vmem:[%s442 + $0x8] sm:$0xff]
    %v445 = vld [vmem:[%s442 + $0x10] sm:$0xff]
    %v446 = vld [vmem:[%s442 + $0x18] sm:$0xff]
    %v447 = vld [vmem:[%s442 + $0x20] sm:$0xff]
    %v448 = vld [vmem:[%s442 + $0x28] sm:$0xff]
    %v449 = vld [vmem:[%s442 + $0x30] sm:$0xff]
    %v450 = vld [vmem:[%s442 + $0x38] sm:$0xff]
    %v451 = vld [vmem:[%s442 + $0x40] sm:$0xff]
    %v452 = vld [vmem:[%s442 + $0x48] sm:$0xff]
    %v453 = vld [vmem:[%s442 + $0x50] sm:$0xff]
    %v454 = vld [vmem:[%s442 + $0x58] sm:$0xff]
    %v455 = vld [vmem:[%s442 + $0x60] sm:$0xff]
    %v456 = vld [vmem:[%s442 + $0x68] sm:$0xff]
    %v457 = vld [vmem:[%s442 + $0x70] sm:$0xff]
    %v458 = vld [vmem:[%s442 + $0x78] sm:$0xff]
    %459 = vmatprep.subr.mxu0 0.0
    %460 = vmatpush1.msra.mxu0 %v458
    %461 = vmatprep.subr.mxu0 0.0
    %462 = vmatpush1.msra.mxu0 %v457
    %463 = vmatprep.subr.mxu0 0.0
    %464 = vmatpush1.msra.mxu0 %v456
    %465 = vmatprep.subr.mxu0 0.0
    %466 = vmatpush1.msra.mxu0 %v455
    %467 = vmatprep.subr.mxu0 0.0
    %468 = vmatpush1.msra.mxu0 %v454
    %469 = vmatprep.subr.mxu0 0.0
    %470 = vmatpush1.msra.mxu0 %v453
    %471 = vmatprep.subr.mxu0 0.0
    %472 = vmatpush1.msra.mxu0 %v452
    %473 = vmatprep.subr.mxu0 0.0
    %474 = vmatpush1.msra.mxu0 %v451
    %475 = vmatprep.subr.mxu0 0.0
    %476 = vmatpush1.msra.mxu0 %v450
    %477 = vmatprep.subr.mxu0 0.0
    %478 = vmatpush1.msra.mxu0 %v449
    %479 = vmatprep.subr.mxu0 0.0
    %480 = vmatpush1.msra.mxu0 %v448
    %481 = vmatprep.subr.mxu0 0.0
    %482 = vmatpush1.msra.mxu0 %v447
    %483 = vmatprep.subr.mxu0 0.0
    %484 = vmatpush1.msra.mxu0 %v446
    %485 = vmatprep.subr.mxu0 0.0
    %486 = vmatpush1.msra.mxu0 %v445
    %487 = vmatprep.subr.mxu0 0.0
    %488 = vmatpush1.msra.mxu0 %v444
    %489 = vmatprep.subr.mxu0 0.0
    %490 = vmatpush1.msra.mxu0 %v443
    %491 = vmatprep.subr.mxu0 0.0
    %492 = vmatpush2.msra.mxu0 0.0
    %493 = vmatprep.subr.mxu0 0.0
    %494 = vmatpush2.msra.mxu0 0.0
    %495 = vmatprep.subr.mxu0 0.0
    %496 = vmatpush2.msra.mxu0 0.0
    %497 = vmatprep.subr.mxu0 0.0
    %498 = vmatpush2.msra.mxu0 0.0
    %499 = vmatprep.subr.mxu0 0.0
    %500 = vmatpush2.msra.mxu0 0.0
    %501 = vmatprep.subr.mxu0 0.0
    %502 = vmatpush2.msra.mxu0 0.0
    %503 = vmatprep.subr.mxu0 0.0
    %504 = vmatpush2.msra.mxu0 0.0
    %505 = vmatprep.subr.mxu0 0.0
    %506 = vmatpush2.msra.mxu0 0.0
    %507 = vmatprep.subr.mxu0 0.0
    %508 = vmatpush2.msra.mxu0 0.0
    %509 = vmatprep.subr.mxu0 0.0
    %510 = vmatpush2.msra.mxu0 0.0
    %511 = vmatprep.subr.mxu0 0.0
    %512 = vmatpush2.msra.mxu0 0.0
    %513 = vmatprep.subr.mxu0 0.0
    %514 = vmatpush2.msra.mxu0 0.0
    %515 = vmatprep.subr.mxu0 0.0
    %516 = vmatpush2.msra.mxu0 0.0
    %517 = vmatprep.subr.mxu0 0.0
    %518 = vmatpush2.msra.mxu0 0.0
    %519 = vmatprep.subr.mxu0 0.0
    %520 = vmatpush2.msra.mxu0 0.0
    %521 = vmatprep.subr.mxu0 0.0
    %522 = vmatpush2.msra.mxu0 0.0
    %523 = vmatprep.mubr.f32.mxu0 0.0
    %524 = vmatmul.mubr.f32.gmra.mxu0 %v426
    %v525 = vpop.f32.mrf.mxu0
    %v526 = vadd.f32 0.0, %v525
    %v527 = vpop.f32.mrf.mxu0
    %528 = vmatprep.mubr.f32.mxu0 0.0
    %529 = vmatmul.mubr.f32.gmra.mxu0 %v427
    %v530 = vpop.f32.mrf.mxu0
    %v531 = vadd.f32 0.0, %v530
    %v532 = vpop.f32.mrf.mxu0
    %533 = vmatprep.mubr.f32.mxu0 0.0
    %534 = vmatmul.mubr.f32.gmra.mxu0 %v428
    %v535 = vpop.f32.mrf.mxu0
    %v536 = vadd.f32 0.0, %v535
    %v537 = vpop.f32.mrf.mxu0
    %538 = vmatprep.mubr.f32.mxu0 0.0
    %539 = vmatmul.mubr.f32.gmra.mxu0 %v429
    %v540 = vpop.f32.mrf.mxu0
    %v541 = vadd.f32 0.0, %v540
    %v542 = vpop.f32.mrf.mxu0
    %543 = vmatprep.mubr.f32.mxu0 0.0
    %544 = vmatmul.mubr.f32.gmra.mxu0 %v430
    %v545 = vpop.f32.mrf.mxu0
    %v546 = vadd.f32 0.0, %v545
    %v547 = vpop.f32.mrf.mxu0
    %548 = vmatprep.mubr.f32.mxu0 0.0
    %549 = vmatmul.mubr.f32.gmra.mxu0 %v431
    %v550 = vpop.f32.mrf.mxu0
    %v551 = vadd.f32 0.0, %v550
    %v552 = vpop.f32.mrf.mxu0
    %553 = vmatprep.mubr.f32.mxu0 0.0
    %554 = vmatmul.mubr.f32.gmra.mxu0 %v432
    %v555 = vpop.f32.mrf.mxu0
    %v556 = vadd.f32 0.0, %v555
    %v557 = vpop.f32.mrf.mxu0
    %558 = vmatprep.mubr.f32.mxu0 0.0
    %559 = vmatmul.mubr.f32.gmra.mxu0 %v433
    %v560 = vpop.f32.mrf.mxu0
    %v561 = vadd.f32 0.0, %v560
    %v562 = vpop.f32.mrf.mxu0
    %563 = vmatprep.mubr.f32.mxu0 0.0
    %564 = vmatmul.mubr.f32.gmra.mxu0 %v434
    %v565 = vpop.f32.mrf.mxu0
    %v566 = vadd.f32 0.0, %v565
    %v567 = vpop.f32.mrf.mxu0
    %568 = vmatprep.mubr.f32.mxu0 0.0
    %569 = vmatmul.mubr.f32.gmra.mxu0 %v435
    %v570 = vpop.f32.mrf.mxu0
    %v571 = vadd.f32 0.0, %v570
    %v572 = vpop.f32.mrf.mxu0
    %573 = vmatprep.mubr.f32.mxu0 0.0
    %574 = vmatmul.mubr.f32.gmra.mxu0 %v436
    %v575 = vpop.f32.mrf.mxu0
    %v576 = vadd.f32 0.0, %v575
    %v577 = vpop.f32.mrf.mxu0
    %578 = vmatprep.mubr.f32.mxu0 0.0
    %579 = vmatmul.mubr.f32.gmra.mxu0 %v437
    %v580 = vpop.f32.mrf.mxu0
    %v581 = vadd.f32 0.0, %v580
    %v582 = vpop.f32.mrf.mxu0
    %583 = vmatprep.mubr.f32.mxu0 0.0
    %584 = vmatmul.mubr.f32.gmra.mxu0 %v438
    %v585 = vpop.f32.mrf.mxu0
    %v586 = vadd.f32 0.0, %v585
    %v587 = vpop.f32.mrf.mxu0
    %588 = vmatprep.mubr.f32.mxu0 0.0
    %589 = vmatmul.mubr.f32.gmra.mxu0 %v439
    %v590 = vpop.f32.mrf.mxu0
    %v591 = vadd.f32 0.0, %v590
    %v592 = vpop.f32.mrf.mxu0
    %593 = vmatprep.mubr.f32.mxu0 0.0
    %594 = vmatmul.mubr.f32.gmra.mxu0 %v440
    %v595 = vpop.f32.mrf.mxu0
    %v596 = vadd.f32 0.0, %v595
    %v597 = vpop.f32.mrf.mxu0
    %598 = vmatprep.mubr.f32.mxu0 0.0
    %599 = vmatmul.mubr.f32.gmra.mxu0 %v441
    %v600 = vpop.f32.mrf.mxu0
    %v601 = vadd.f32 0.0, %v600
    %v602 = vpop.f32.mrf.mxu0
    %603 = vdwg.mxu0
    %v604 = vmax.f32 %v526, 0.0
    %v605 = vmax.f32 %v531, 0.0
    %v606 = vmax.f32 %v536, 0.0
    %v607 = vmax.f32 %v541, 0.0
    %v608 = vmax.f32 %v546, 0.0
    %v609 = vmax.f32 %v551, 0.0
    %v610 = vmax.f32 %v556, 0.0
    %v611 = vmax.f32 %v561, 0.0
    %v612 = vmax.f32 %v566, 0.0
    %v613 = vmax.f32 %v571, 0.0
    %v614 = vmax.f32 %v576, 0.0
    %v615 = vmax.f32 %v581, 0.0
    %v616 = vmax.f32 %v586, 0.0
    %v617 = vmax.f32 %v591, 0.0
    %v618 = vmax.f32 %v596, 0.0
    %v619 = vmax.f32 %v601, 0.0
    %s620 = scalar_lea.vmem [#allocation2], 256
    %v621 = vld [vmem:[%s620] sm:$0xff]
    %v622 = vld [vmem:[%s620 + $0x8] sm:$0xff]
    %v623 = vld [vmem:[%s620 + $0x10] sm:$0xff]
    %v624 = vld [vmem:[%s620 + $0x18] sm:$0xff]
    %v625 = vld [vmem:[%s620 + $0x20] sm:$0xff]
    %v626 = vld [vmem:[%s620 + $0x28] sm:$0xff]
    %v627 = vld [vmem:[%s620 + $0x30] sm:$0xff]
    %v628 = vld [vmem:[%s620 + $0x38] sm:$0xff]
    %v629 = vld [vmem:[%s620 + $0x40] sm:$0xff]
    %v630 = vld [vmem:[%s620 + $0x48] sm:$0xff]
    %v631 = vld [vmem:[%s620 + $0x50] sm:$0xff]
    %v632 = vld [vmem:[%s620 + $0x58] sm:$0xff]
    %v633 = vld [vmem:[%s620 + $0x60] sm:$0xff]
    %v634 = vld [vmem:[%s620 + $0x68] sm:$0xff]
    %v635 = vld [vmem:[%s620 + $0x70] sm:$0xff]
    %v636 = vld [vmem:[%s620 + $0x78] sm:$0xff]
    %637 = vmatprep.subr.mxu0 0.0
    %638 = vmatpush1.msra.mxu0 %v636
    %639 = vmatprep.subr.mxu0 0.0
    %640 = vmatpush1.msra.mxu0 %v635
    %641 = vmatprep.subr.mxu0 0.0
    %642 = vmatpush1.msra.mxu0 %v634
    %643 = vmatprep.subr.mxu0 0.0
    %644 = vmatpush1.msra.mxu0 %v633
    %645 = vmatprep.subr.mxu0 0.0
    %646 = vmatpush1.msra.mxu0 %v632
    %647 = vmatprep.subr.mxu0 0.0
    %648 = vmatpush1.msra.mxu0 %v631
    %649 = vmatprep.subr.mxu0 0.0
    %650 = vmatpush1.msra.mxu0 %v630
    %651 = vmatprep.subr.mxu0 0.0
    %652 = vmatpush1.msra.mxu0 %v629
    %653 = vmatprep.subr.mxu0 0.0
    %654 = vmatpush1.msra.mxu0 %v628
    %655 = vmatprep.subr.mxu0 0.0
    %656 = vmatpush1.msra.mxu0 %v627
    %657 = vmatprep.subr.mxu0 0.0
    %658 = vmatpush1.msra.mxu0 %v626
    %659 = vmatprep.subr.mxu0 0.0
    %660 = vmatpush1.msra.mxu0 %v625
    %661 = vmatprep.subr.mxu0 0.0
    %662 = vmatpush1.msra.mxu0 %v624
    %663 = vmatprep.subr.mxu0 0.0
    %664 = vmatpush1.msra.mxu0 %v623
    %665 = vmatprep.subr.mxu0 0.0
    %666 = vmatpush1.msra.mxu0 %v622
    %667 = vmatprep.subr.mxu0 0.0
    %668 = vmatpush1.msra.mxu0 %v621
    %669 = vmatprep.subr.mxu0 0.0
    %670 = vmatpush2.msra.mxu0 0.0
    %671 = vmatprep.subr.mxu0 0.0
    %672 = vmatpush2.msra.mxu0 0.0
    %673 = vmatprep.subr.mxu0 0.0
    %674 = vmatpush2.msra.mxu0 0.0
    %675 = vmatprep.subr.mxu0 0.0
    %676 = vmatpush2.msra.mxu0 0.0
    %677 = vmatprep.subr.mxu0 0.0
    %678 = vmatpush2.msra.mxu0 0.0
    %679 = vmatprep.subr.mxu0 0.0
    %680 = vmatpush2.msra.mxu0 0.0
    %681 = vmatprep.subr.mxu0 0.0
    %682 = vmatpush2.msra.mxu0 0.0
    %683 = vmatprep.subr.mxu0 0.0
    %684 = vmatpush2.msra.mxu0 0.0
    %685 = vmatprep.subr.mxu0 0.0
    %686 = vmatpush2.msra.mxu0 0.0
    %687 = vmatprep.subr.mxu0 0.0
    %688 = vmatpush2.msra.mxu0 0.0
    %689 = vmatprep.subr.mxu0 0.0
    %690 = vmatpush2.msra.mxu0 0.0
    %691 = vmatprep.subr.mxu0 0.0
    %692 = vmatpush2.msra.mxu0 0.0
    %693 = vmatprep.subr.mxu0 0.0
    %694 = vmatpush2.msra.mxu0 0.0
    %695 = vmatprep.subr.mxu0 0.0
    %696 = vmatpush2.msra.mxu0 0.0
    %697 = vmatprep.subr.mxu0 0.0
    %698 = vmatpush2.msra.mxu0 0.0
    %699 = vmatprep.subr.mxu0 0.0
    %700 = vmatpush2.msra.mxu0 0.0
    %701 = vmatprep.mubr.f32.mxu0 0.0
    %702 = vmatmul.mubr.f32.gmra.mxu0 %v604
    %v703 = vpop.f32.mrf.mxu0
    %v704 = vadd.f32 0.0, %v703
    %v705 = vpop.f32.mrf.mxu0
    %706 = vmatprep.mubr.f32.mxu0 0.0
    %707 = vmatmul.mubr.f32.gmra.mxu0 %v605
    %v708 = vpop.f32.mrf.mxu0
    %v709 = vadd.f32 0.0, %v708
    %v710 = vpop.f32.mrf.mxu0
    %711 = vmatprep.mubr.f32.mxu0 0.0
    %712 = vmatmul.mubr.f32.gmra.mxu0 %v606
    %v713 = vpop.f32.mrf.mxu0
    %v714 = vadd.f32 0.0, %v713
    %v715 = vpop.f32.mrf.mxu0
    %716 = vmatprep.mubr.f32.mxu0 0.0
    %717 = vmatmul.mubr.f32.gmra.mxu0 %v607
    %v718 = vpop.f32.mrf.mxu0
    %v719 = vadd.f32 0.0, %v718
    %v720 = vpop.f32.mrf.mxu0
    %721 = vmatprep.mubr.f32.mxu0 0.0
    %722 = vmatmul.mubr.f32.gmra.mxu0 %v608
    %v723 = vpop.f32.mrf.mxu0
    %v724 = vadd.f32 0.0, %v723
    %v725 = vpop.f32.mrf.mxu0
    %726 = vmatprep.mubr.f32.mxu0 0.0
    %727 = vmatmul.mubr.f32.gmra.mxu0 %v609
    %v728 = vpop.f32.mrf.mxu0
    %v729 = vadd.f32 0.0, %v728
    %v730 = vpop.f32.mrf.mxu0
    %731 = vmatprep.mubr.f32.mxu0 0.0
    %732 = vmatmul.mubr.f32.gmra.mxu0 %v610
    %v733 = vpop.f32.mrf.mxu0
    %v734 = vadd.f32 0.0, %v733
    %v735 = vpop.f32.mrf.mxu0
    %736 = vmatprep.mubr.f32.mxu0 0.0
    %737 = vmatmul.mubr.f32.gmra.mxu0 %v611
    %v738 = vpop.f32.mrf.mxu0
    %v739 = vadd.f32 0.0, %v738
    %v740 = vpop.f32.mrf.mxu0
    %741 = vmatprep.mubr.f32.mxu0 0.0
    %742 = vmatmul.mubr.f32.gmra.mxu0 %v612
    %v743 = vpop.f32.mrf.mxu0
    %v744 = vadd.f32 0.0, %v743
    %v745 = vpop.f32.mrf.mxu0
    %746 = vmatprep.mubr.f32.mxu0 0.0
    %747 = vmatmul.mubr.f32.gmra.mxu0 %v613
    %v748 = vpop.f32.mrf.mxu0
    %v749 = vadd.f32 0.0, %v748
    %v750 = vpop.f32.mrf.mxu0
    %751 = vmatprep.mubr.f32.mxu0 0.0
    %752 = vmatmul.mubr.f32.gmra.mxu0 %v614
    %v753 = vpop.f32.mrf.mxu0
    %v754 = vadd.f32 0.0, %v753
    %v755 = vpop.f32.mrf.mxu0
    %756 = vmatprep.mubr.f32.mxu0 0.0
    %757 = vmatmul.mubr.f32.gmra.mxu0 %v615
    %v758 = vpop.f32.mrf.mxu0
    %v759 = vadd.f32 0.0, %v758
    %v760 = vpop.f32.mrf.mxu0
    %761 = vmatprep.mubr.f32.mxu0 0.0
    %762 = vmatmul.mubr.f32.gmra.mxu0 %v616
    %v763 = vpop.f32.mrf.mxu0
    %v764 = vadd.f32 0.0, %v763
    %v765 = vpop.f32.mrf.mxu0
    %766 = vmatprep.mubr.f32.mxu0 0.0
    %767 = vmatmul.mubr.f32.gmra.mxu0 %v617
    %v768 = vpop.f32.mrf.mxu0
    %v769 = vadd.f32 0.0, %v768
    %v770 = vpop.f32.mrf.mxu0
    %771 = vmatprep.mubr.f32.mxu0 0.0
    %772 = vmatmul.mubr.f32.gmra.mxu0 %v618
    %v773 = vpop.f32.mrf.mxu0
    %v774 = vadd.f32 0.0, %v773
    %v775 = vpop.f32.mrf.mxu0
    %776 = vmatprep.mubr.f32.mxu0 0.0
    %777 = vmatmul.mubr.f32.gmra.mxu0 %v619
    %v778 = vpop.f32.mrf.mxu0
    %v779 = vadd.f32 0.0, %v778
    %v780 = vpop.f32.mrf.mxu0
    %781 = vdwg.mxu0
    %v782 = vld [vmem:[%s1] sm:$0xff]
    %v783 = vld [vmem:[%s1 + $0x8] sm:$0xff]
    %v784 = vld [vmem:[%s1 + $0x10] sm:$0xff]
    %v785 = vld [vmem:[%s1 + $0x18] sm:$0xff]
    %v786 = vld [vmem:[%s1 + $0x20] sm:$0xff]
    %v787 = vld [vmem:[%s1 + $0x28] sm:$0xff]
    %v788 = vld [vmem:[%s1 + $0x30] sm:$0xff]
    %v789 = vld [vmem:[%s1 + $0x38] sm:$0xff]
    %v790 = vld [vmem:[%s1 + $0x40] sm:$0xff]
    %v791 = vld [vmem:[%s1 + $0x48] sm:$0xff]
    %v792 = vld [vmem:[%s1 + $0x50] sm:$0xff]
    %v793 = vld [vmem:[%s1 + $0x58] sm:$0xff]
    %v794 = vld [vmem:[%s1 + $0x60] sm:$0xff]
    %v795 = vld [vmem:[%s1 + $0x68] sm:$0xff]
    %v796 = vld [vmem:[%s1 + $0x70] sm:$0xff]
    %v797 = vld [vmem:[%s1 + $0x78] sm:$0xff]
    %v798 = vld [vmem:[%s3] sm:$0xff]
    %vm799 = vcmask 64512
    %v801 = vsel %vm799, %v782, 0
    %v804 = vsel %vm799, %v783, 0
    %v807 = vsel %vm799, %v784, 0
    %v810 = vsel %vm799, %v785, 0
    %v813 = vsel %vm799, %v786, 0
    %v816 = vsel %vm799, %v787, 0
    %v819 = vsel %vm799, %v788, 0
    %v822 = vsel %vm799, %v789, 0
    %v825 = vsel %vm799, %v790, 0
    %v828 = vsel %vm799, %v791, 0
    %v831 = vsel %vm799, %v792, 0
    %v834 = vsel %vm799, %v793, 0
    %v837 = vsel %vm799, %v794, 0
    %v840 = vsel %vm799, %v795, 0
    %v843 = vsel %vm799, %v796, 0
    %v846 = vsel %vm799, %v797, 0
    %848 = vmatprep.subr.mxu0 0.0
    %849 = vmatpush1.msra.mxu0 0.0
    %850 = vmatprep.subr.mxu0 0.0
    %851 = vmatpush1.msra.mxu0 0.0
    %852 = vmatprep.subr.mxu0 0.0
    %853 = vmatpush1.msra.mxu0 0.0
    %854 = vmatprep.subr.mxu0 0.0
    %855 = vmatpush1.msra.mxu0 0.0
    %856 = vmatprep.subr.mxu0 0.0
    %857 = vmatpush1.msra.mxu0 0.0
    %858 = vmatprep.subr.mxu0 0.0
    %859 = vmatpush1.msra.mxu0 0.0
    %860 = vmatprep.subr.mxu0 0.0
    %861 = vmatpush1.msra.mxu0 0.0
    %862 = vmatprep.subr.mxu0 0.0
    %863 = vmatpush1.msra.mxu0 0.0
    %864 = vmatprep.subr.mxu0 0.0
    %865 = vmatpush1.msra.mxu0 0.0
    %866 = vmatprep.subr.mxu0 0.0
    %867 = vmatpush1.msra.mxu0 0.0
    %868 = vmatprep.subr.mxu0 0.0
    %869 = vmatpush1.msra.mxu0 0.0
    %870 = vmatprep.subr.mxu0 0.0
    %871 = vmatpush1.msra.mxu0 0.0
    %872 = vmatprep.subr.mxu0 0.0
    %873 = vmatpush1.msra.mxu0 0.0
    %874 = vmatprep.subr.mxu0 0.0
    %875 = vmatpush1.msra.mxu0 0.0
    %876 = vmatprep.subr.mxu0 0.0
    %877 = vmatpush1.msra.mxu0 0.0
    %878 = vmatprep.subr.mxu0 0.0
    %879 = vmatpush1.msra.mxu0 %v798
    %880 = vmatprep.subr.mxu0 0.0
    %881 = vmatpush2.msra.mxu0 0.0
    %882 = vmatprep.subr.mxu0 0.0
    %883 = vmatpush2.msra.mxu0 0.0
    %884 = vmatprep.subr.mxu0 0.0
    %885 = vmatpush2.msra.mxu0 0.0
    %886 = vmatprep.subr.mxu0 0.0
    %887 = vmatpush2.msra.mxu0 0.0
    %888 = vmatprep.subr.mxu0 0.0
    %889 = vmatpush2.msra.mxu0 0.0
    %890 = vmatprep.subr.mxu0 0.0
    %891 = vmatpush2.msra.mxu0 0.0
    %892 = vmatprep.subr.mxu0 0.0
    %893 = vmatpush2.msra.mxu0 0.0
    %894 = vmatprep.subr.mxu0 0.0
    %895 = vmatpush2.msra.mxu0 0.0
    %896 = vmatprep.subr.mxu0 0.0
    %897 = vmatpush2.msra.mxu0 0.0
    %898 = vmatprep.subr.mxu0 0.0
    %899 = vmatpush2.msra.mxu0 0.0
    %900 = vmatprep.subr.mxu0 0.0
    %901 = vmatpush2.msra.mxu0 0.0
    %902 = vmatprep.subr.mxu0 0.0
    %903 = vmatpush2.msra.mxu0 0.0
    %904 = vmatprep.subr.mxu0 0.0
    %905 = vmatpush2.msra.mxu0 0.0
    %906 = vmatprep.subr.mxu0 0.0
    %907 = vmatpush2.msra.mxu0 0.0
    %908 = vmatprep.subr.mxu0 0.0
    %909 = vmatpush2.msra.mxu0 0.0
    %910 = vmatprep.subr.mxu0 0.0
    %911 = vmatpush2.msra.mxu0 0.0
    %912 = vmatprep.mubr.f32.mxu0 0.0
    %913 = vmatmul.mubr.f32.gmra.mxu0 %v801
    %v914 = vpop.f32.mrf.mxu0
    %v915 = vadd.f32 0.0, %v914
    %v916 = vpop.f32.mrf.mxu0
    %917 = vmatprep.mubr.f32.mxu0 0.0
    %918 = vmatmul.mubr.f32.gmra.mxu0 %v804
    %v919 = vpop.f32.mrf.mxu0
    %v920 = vadd.f32 0.0, %v919
    %v921 = vpop.f32.mrf.mxu0
    %922 = vmatprep.mubr.f32.mxu0 0.0
    %923 = vmatmul.mubr.f32.gmra.mxu0 %v807
    %v924 = vpop.f32.mrf.mxu0
    %v925 = vadd.f32 0.0, %v924
    %v926 = vpop.f32.mrf.mxu0
    %927 = vmatprep.mubr.f32.mxu0 0.0
    %928 = vmatmul.mubr.f32.gmra.mxu0 %v810
    %v929 = vpop.f32.mrf.mxu0
    %v930 = vadd.f32 0.0, %v929
    %v931 = vpop.f32.mrf.mxu0
    %932 = vmatprep.mubr.f32.mxu0 0.0
    %933 = vmatmul.mubr.f32.gmra.mxu0 %v813
    %v934 = vpop.f32.mrf.mxu0
    %v935 = vadd.f32 0.0, %v934
    %v936 = vpop.f32.mrf.mxu0
    %937 = vmatprep.mubr.f32.mxu0 0.0
    %938 = vmatmul.mubr.f32.gmra.mxu0 %v816
    %v939 = vpop.f32.mrf.mxu0
    %v940 = vadd.f32 0.0, %v939
    %v941 = vpop.f32.mrf.mxu0
    %942 = vmatprep.mubr.f32.mxu0 0.0
    %943 = vmatmul.mubr.f32.gmra.mxu0 %v819
    %v944 = vpop.f32.mrf.mxu0
    %v945 = vadd.f32 0.0, %v944
    %v946 = vpop.f32.mrf.mxu0
    %947 = vmatprep.mubr.f32.mxu0 0.0
    %948 = vmatmul.mubr.f32.gmra.mxu0 %v822
    %v949 = vpop.f32.mrf.mxu0
    %v950 = vadd.f32 0.0, %v949
    %v951 = vpop.f32.mrf.mxu0
    %952 = vmatprep.mubr.f32.mxu0 0.0
    %953 = vmatmul.mubr.f32.gmra.mxu0 %v825
    %v954 = vpop.f32.mrf.mxu0
    %v955 = vadd.f32 0.0, %v954
    %v956 = vpop.f32.mrf.mxu0
    %957 = vmatprep.mubr.f32.mxu0 0.0
    %958 = vmatmul.mubr.f32.gmra.mxu0 %v828
    %v959 = vpop.f32.mrf.mxu0
    %v960 = vadd.f32 0.0, %v959
    %v961 = vpop.f32.mrf.mxu0
    %962 = vmatprep.mubr.f32.mxu0 0.0
    %963 = vmatmul.mubr.f32.gmra.mxu0 %v831
    %v964 = vpop.f32.mrf.mxu0
    %v965 = vadd.f32 0.0, %v964
    %v966 = vpop.f32.mrf.mxu0
    %967 = vmatprep.mubr.f32.mxu0 0.0
    %968 = vmatmul.mubr.f32.gmra.mxu0 %v834
    %v969 = vpop.f32.mrf.mxu0
    %v970 = vadd.f32 0.0, %v969
    %v971 = vpop.f32.mrf.mxu0
    %972 = vmatprep.mubr.f32.mxu0 0.0
    %973 = vmatmul.mubr.f32.gmra.mxu0 %v837
    %v974 = vpop.f32.mrf.mxu0
    %v975 = vadd.f32 0.0, %v974
    %v976 = vpop.f32.mrf.mxu0
    %977 = vmatprep.mubr.f32.mxu0 0.0
    %978 = vmatmul.mubr.f32.gmra.mxu0 %v840
    %v979 = vpop.f32.mrf.mxu0
    %v980 = vadd.f32 0.0, %v979
    %v981 = vpop.f32.mrf.mxu0
    %982 = vmatprep.mubr.f32.mxu0 0.0
    %983 = vmatmul.mubr.f32.gmra.mxu0 %v843
    %v984 = vpop.f32.mrf.mxu0
    %v985 = vadd.f32 0.0, %v984
    %v986 = vpop.f32.mrf.mxu0
    %987 = vmatprep.mubr.f32.mxu0 0.0
    %988 = vmatmul.mubr.f32.gmra.mxu0 %v846
    %v989 = vpop.f32.mrf.mxu0
    %v990 = vadd.f32 0.0, %v989
    %v991 = vpop.f32.mrf.mxu0
    %992 = vdwg.mxu0
    %v993 = vmul.f32 %v704, %v915
    %v994 = vmul.f32 %v709, %v920
    %v995 = vmul.f32 %v714, %v925
    %v996 = vmul.f32 %v719, %v930
    %v997 = vmul.f32 %v724, %v935
    %v998 = vmul.f32 %v729, %v940
    %v999 = vmul.f32 %v734, %v945
    %v1000 = vmul.f32 %v739, %v950
    %v1001 = vmul.f32 %v744, %v955
    %v1002 = vmul.f32 %v749, %v960
    %v1003 = vmul.f32 %v754, %v965
    %v1004 = vmul.f32 %v759, %v970
    %v1005 = vmul.f32 %v764, %v975
    %v1006 = vmul.f32 %v769, %v980
    %v1007 = vmul.f32 %v774, %v985
    %v1008 = vmul.f32 %v779, %v990
    %s1009 = scalar_lea.vmem [#allocation2], 384
    %v1010 = vld [vmem:[%s1009] sm:$0xff]
    %v1011 = vld [vmem:[%s1009 + $0x8] sm:$0xff]
    %v1012 = vld [vmem:[%s1009 + $0x10] sm:$0xff]
    %v1013 = vld [vmem:[%s1009 + $0x18] sm:$0xff]
    %v1014 = vld [vmem:[%s1009 + $0x20] sm:$0xff]
    %v1015 = vld [vmem:[%s1009 + $0x28] sm:$0xff]
    %v1016 = vld [vmem:[%s1009 + $0x30] sm:$0xff]
    %v1017 = vld [vmem:[%s1009 + $0x38] sm:$0xff]
    %v1018 = vld [vmem:[%s1009 + $0x40] sm:$0xff]
    %v1019 = vld [vmem:[%s1009 + $0x48] sm:$0xff]
    %v1020 = vld [vmem:[%s1009 + $0x50] sm:$0xff]
    %v1021 = vld [vmem:[%s1009 + $0x58] sm:$0xff]
    %v1022 = vld [vmem:[%s1009 + $0x60] sm:$0xff]
    %v1023 = vld [vmem:[%s1009 + $0x68] sm:$0xff]
    %v1024 = vld [vmem:[%s1009 + $0x70] sm:$0xff]
    %v1025 = vld [vmem:[%s1009 + $0x78] sm:$0xff]
    %1026 = vmatprep.subr.mxu0 0.0
    %1027 = vmatpush1.msra.mxu0 %v1025
    %1028 = vmatprep.subr.mxu0 0.0
    %1029 = vmatpush1.msra.mxu0 %v1024
    %1030 = vmatprep.subr.mxu0 0.0
    %1031 = vmatpush1.msra.mxu0 %v1023
    %1032 = vmatprep.subr.mxu0 0.0
    %1033 = vmatpush1.msra.mxu0 %v1022
    %1034 = vmatprep.subr.mxu0 0.0
    %1035 = vmatpush1.msra.mxu0 %v1021
    %1036 = vmatprep.subr.mxu0 0.0
    %1037 = vmatpush1.msra.mxu0 %v1020
    %1038 = vmatprep.subr.mxu0 0.0
    %1039 = vmatpush1.msra.mxu0 %v1019
    %1040 = vmatprep.subr.mxu0 0.0
    %1041 = vmatpush1.msra.mxu0 %v1018
    %1042 = vmatprep.subr.mxu0 0.0
    %1043 = vmatpush1.msra.mxu0 %v1017
    %1044 = vmatprep.subr.mxu0 0.0
    %1045 = vmatpush1.msra.mxu0 %v1016
    %1046 = vmatprep.subr.mxu0 0.0
    %1047 = vmatpush1.msra.mxu0 %v1015
    %1048 = vmatprep.subr.mxu0 0.0
    %1049 = vmatpush1.msra.mxu0 %v1014
    %1050 = vmatprep.subr.mxu0 0.0
    %1051 = vmatpush1.msra.mxu0 %v1013
    %1052 = vmatprep.subr.mxu0 0.0
    %1053 = vmatpush1.msra.mxu0 %v1012
    %1054 = vmatprep.subr.mxu0 0.0
    %1055 = vmatpush1.msra.mxu0 %v1011
    %1056 = vmatprep.subr.mxu0 0.0
    %1057 = vmatpush1.msra.mxu0 %v1010
    %1058 = vmatprep.subr.mxu0 0.0
    %1059 = vmatpush2.msra.mxu0 0.0
    %1060 = vmatprep.subr.mxu0 0.0
    %1061 = vmatpush2.msra.mxu0 0.0
    %1062 = vmatprep.subr.mxu0 0.0
    %1063 = vmatpush2.msra.mxu0 0.0
    %1064 = vmatprep.subr.mxu0 0.0
    %1065 = vmatpush2.msra.mxu0 0.0
    %1066 = vmatprep.subr.mxu0 0.0
    %1067 = vmatpush2.msra.mxu0 0.0
    %1068 = vmatprep.subr.mxu0 0.0
    %1069 = vmatpush2.msra.mxu0 0.0
    %1070 = vmatprep.subr.mxu0 0.0
    %1071 = vmatpush2.msra.mxu0 0.0
    %1072 = vmatprep.subr.mxu0 0.0
    %1073 = vmatpush2.msra.mxu0 0.0
    %1074 = vmatprep.subr.mxu0 0.0
    %1075 = vmatpush2.msra.mxu0 0.0
    %1076 = vmatprep.subr.mxu0 0.0
    %1077 = vmatpush2.msra.mxu0 0.0
    %1078 = vmatprep.subr.mxu0 0.0
    %1079 = vmatpush2.msra.mxu0 0.0
    %1080 = vmatprep.subr.mxu0 0.0
    %1081 = vmatpush2.msra.mxu0 0.0
    %1082 = vmatprep.subr.mxu0 0.0
    %1083 = vmatpush2.msra.mxu0 0.0
    %1084 = vmatprep.subr.mxu0 0.0
    %1085 = vmatpush2.msra.mxu0 0.0
    %1086 = vmatprep.subr.mxu0 0.0
    %1087 = vmatpush2.msra.mxu0 0.0
    %1088 = vmatprep.subr.mxu0 0.0
    %1089 = vmatpush2.msra.mxu0 0.0
    %1090 = vmatprep.mubr.f32.mxu0 0.0
    %1091 = vmatmul.mubr.f32.gmra.mxu0 %v993
    %v1092 = vpop.f32.mrf.mxu0
    %v1093 = vadd.f32 0.0, %v1092
    %v1094 = vpop.f32.mrf.mxu0
    %1095 = vmatprep.mubr.f32.mxu0 0.0
    %1096 = vmatmul.mubr.f32.gmra.mxu0 %v994
    %v1097 = vpop.f32.mrf.mxu0
    %v1098 = vadd.f32 0.0, %v1097
    %v1099 = vpop.f32.mrf.mxu0
    %1100 = vmatprep.mubr.f32.mxu0 0.0
    %1101 = vmatmul.mubr.f32.gmra.mxu0 %v995
    %v1102 = vpop.f32.mrf.mxu0
    %v1103 = vadd.f32 0.0, %v1102
    %v1104 = vpop.f32.mrf.mxu0
    %1105 = vmatprep.mubr.f32.mxu0 0.0
    %1106 = vmatmul.mubr.f32.gmra.mxu0 %v996
    %v1107 = vpop.f32.mrf.mxu0
    %v1108 = vadd.f32 0.0, %v1107
    %v1109 = vpop.f32.mrf.mxu0
    %1110 = vmatprep.mubr.f32.mxu0 0.0
    %1111 = vmatmul.mubr.f32.gmra.mxu0 %v997
    %v1112 = vpop.f32.mrf.mxu0
    %v1113 = vadd.f32 0.0, %v1112
    %v1114 = vpop.f32.mrf.mxu0
    %1115 = vmatprep.mubr.f32.mxu0 0.0
    %1116 = vmatmul.mubr.f32.gmra.mxu0 %v998
    %v1117 = vpop.f32.mrf.mxu0
    %v1118 = vadd.f32 0.0, %v1117
    %v1119 = vpop.f32.mrf.mxu0
    %1120 = vmatprep.mubr.f32.mxu0 0.0
    %1121 = vmatmul.mubr.f32.gmra.mxu0 %v999
    %v1122 = vpop.f32.mrf.mxu0
    %v1123 = vadd.f32 0.0, %v1122
    %v1124 = vpop.f32.mrf.mxu0
    %1125 = vmatprep.mubr.f32.mxu0 0.0
    %1126 = vmatmul.mubr.f32.gmra.mxu0 %v1000
    %v1127 = vpop.f32.mrf.mxu0
    %v1128 = vadd.f32 0.0, %v1127
    %v1129 = vpop.f32.mrf.mxu0
    %1130 = vmatprep.mubr.f32.mxu0 0.0
    %1131 = vmatmul.mubr.f32.gmra.mxu0 %v1001
    %v1132 = vpop.f32.mrf.mxu0
    %v1133 = vadd.f32 0.0, %v1132
    %v1134 = vpop.f32.mrf.mxu0
    %1135 = vmatprep.mubr.f32.mxu0 0.0
    %1136 = vmatmul.mubr.f32.gmra.mxu0 %v1002
    %v1137 = vpop.f32.mrf.mxu0
    %v1138 = vadd.f32 0.0, %v1137
    %v1139 = vpop.f32.mrf.mxu0
    %1140 = vmatprep.mubr.f32.mxu0 0.0
    %1141 = vmatmul.mubr.f32.gmra.mxu0 %v1003
    %v1142 = vpop.f32.mrf.mxu0
    %v1143 = vadd.f32 0.0, %v1142
    %v1144 = vpop.f32.mrf.mxu0
    %1145 = vmatprep.mubr.f32.mxu0 0.0
    %1146 = vmatmul.mubr.f32.gmra.mxu0 %v1004
    %v1147 = vpop.f32.mrf.mxu0
    %v1148 = vadd.f32 0.0, %v1147
    %v1149 = vpop.f32.mrf.mxu0
    %1150 = vmatprep.mubr.f32.mxu0 0.0
    %1151 = vmatmul.mubr.f32.gmra.mxu0 %v1005
    %v1152 = vpop.f32.mrf.mxu0
    %v1153 = vadd.f32 0.0, %v1152
    %v1154 = vpop.f32.mrf.mxu0
    %1155 = vmatprep.mubr.f32.mxu0 0.0
    %1156 = vmatmul.mubr.f32.gmra.mxu0 %v1006
    %v1157 = vpop.f32.mrf.mxu0
    %v1158 = vadd.f32 0.0, %v1157
    %v1159 = vpop.f32.mrf.mxu0
    %1160 = vmatprep.mubr.f32.mxu0 0.0
    %1161 = vmatmul.mubr.f32.gmra.mxu0 %v1007
    %v1162 = vpop.f32.mrf.mxu0
    %v1163 = vadd.f32 0.0, %v1162
    %v1164 = vpop.f32.mrf.mxu0
    %1165 = vmatprep.mubr.f32.mxu0 0.0
    %1166 = vmatmul.mubr.f32.gmra.mxu0 %v1008
    %v1167 = vpop.f32.mrf.mxu0
    %v1168 = vadd.f32 0.0, %v1167
    %v1169 = vpop.f32.mrf.mxu0
    %1170 = vdwg.mxu0
    %v1171 = vmax.f32 %v1093, 0.0
    %v1172 = vmax.f32 %v1098, 0.0
    %v1173 = vmax.f32 %v1103, 0.0
    %v1174 = vmax.f32 %v1108, 0.0
    %v1175 = vmax.f32 %v1113, 0.0
    %v1176 = vmax.f32 %v1118, 0.0
    %v1177 = vmax.f32 %v1123, 0.0
    %v1178 = vmax.f32 %v1128, 0.0
    %v1179 = vmax.f32 %v1133, 0.0
    %v1180 = vmax.f32 %v1138, 0.0
    %v1181 = vmax.f32 %v1143, 0.0
    %v1182 = vmax.f32 %v1148, 0.0
    %v1183 = vmax.f32 %v1153, 0.0
    %v1184 = vmax.f32 %v1158, 0.0
    %v1185 = vmax.f32 %v1163, 0.0
    %v1186 = vmax.f32 %v1168, 0.0
    %s1187 = scalar_lea.vmem [#allocation2], 512
    %v1188 = vld [vmem:[%s1187] sm:$0xff]
    %v1189 = vld [vmem:[%s1187 + $0x8] sm:$0xff]
    %v1190 = vld [vmem:[%s1187 + $0x10] sm:$0xff]
    %v1191 = vld [vmem:[%s1187 + $0x18] sm:$0xff]
    %v1192 = vld [vmem:[%s1187 + $0x20] sm:$0xff]
    %v1193 = vld [vmem:[%s1187 + $0x28] sm:$0xff]
    %v1194 = vld [vmem:[%s1187 + $0x30] sm:$0xff]
    %v1195 = vld [vmem:[%s1187 + $0x38] sm:$0xff]
    %v1196 = vld [vmem:[%s1187 + $0x40] sm:$0xff]
    %v1197 = vld [vmem:[%s1187 + $0x48] sm:$0xff]
    %v1198 = vld [vmem:[%s1187 + $0x50] sm:$0xff]
    %v1199 = vld [vmem:[%s1187 + $0x58] sm:$0xff]
    %v1200 = vld [vmem:[%s1187 + $0x60] sm:$0xff]
    %v1201 = vld [vmem:[%s1187 + $0x68] sm:$0xff]
    %v1202 = vld [vmem:[%s1187 + $0x70] sm:$0xff]
    %v1203 = vld [vmem:[%s1187 + $0x78] sm:$0xff]
    %1204 = vmatprep.subr.mxu0 0.0
    %1205 = vmatpush1.msra.mxu0 %v1203
    %1206 = vmatprep.subr.mxu0 0.0
    %1207 = vmatpush1.msra.mxu0 %v1202
    %1208 = vmatprep.subr.mxu0 0.0
    %1209 = vmatpush1.msra.mxu0 %v1201
    %1210 = vmatprep.subr.mxu0 0.0
    %1211 = vmatpush1.msra.mxu0 %v1200
    %1212 = vmatprep.subr.mxu0 0.0
    %1213 = vmatpush1.msra.mxu0 %v1199
    %1214 = vmatprep.subr.mxu0 0.0
    %1215 = vmatpush1.msra.mxu0 %v1198
    %1216 = vmatprep.subr.mxu0 0.0
    %1217 = vmatpush1.msra.mxu0 %v1197
    %1218 = vmatprep.subr.mxu0 0.0
    %1219 = vmatpush1.msra.mxu0 %v1196
    %1220 = vmatprep.subr.mxu0 0.0
    %1221 = vmatpush1.msra.mxu0 %v1195
    %1222 = vmatprep.subr.mxu0 0.0
    %1223 = vmatpush1.msra.mxu0 %v1194
    %1224 = vmatprep.subr.mxu0 0.0
    %1225 = vmatpush1.msra.mxu0 %v1193
    %1226 = vmatprep.subr.mxu0 0.0
    %1227 = vmatpush1.msra.mxu0 %v1192
    %1228 = vmatprep.subr.mxu0 0.0
    %1229 = vmatpush1.msra.mxu0 %v1191
    %1230 = vmatprep.subr.mxu0 0.0
    %1231 = vmatpush1.msra.mxu0 %v1190
    %1232 = vmatprep.subr.mxu0 0.0
    %1233 = vmatpush1.msra.mxu0 %v1189
    %1234 = vmatprep.subr.mxu0 0.0
    %1235 = vmatpush1.msra.mxu0 %v1188
    %1236 = vmatprep.subr.mxu0 0.0
    %1237 = vmatpush2.msra.mxu0 0.0
    %1238 = vmatprep.subr.mxu0 0.0
    %1239 = vmatpush2.msra.mxu0 0.0
    %1240 = vmatprep.subr.mxu0 0.0
    %1241 = vmatpush2.msra.mxu0 0.0
    %1242 = vmatprep.subr.mxu0 0.0
    %1243 = vmatpush2.msra.mxu0 0.0
    %1244 = vmatprep.subr.mxu0 0.0
    %1245 = vmatpush2.msra.mxu0 0.0
    %1246 = vmatprep.subr.mxu0 0.0
    %1247 = vmatpush2.msra.mxu0 0.0
    %1248 = vmatprep.subr.mxu0 0.0
    %1249 = vmatpush2.msra.mxu0 0.0
    %1250 = vmatprep.subr.mxu0 0.0
    %1251 = vmatpush2.msra.mxu0 0.0
    %1252 = vmatprep.subr.mxu0 0.0
    %1253 = vmatpush2.msra.mxu0 0.0
    %1254 = vmatprep.subr.mxu0 0.0
    %1255 = vmatpush2.msra.mxu0 0.0
    %1256 = vmatprep.subr.mxu0 0.0
    %1257 = vmatpush2.msra.mxu0 0.0
    %1258 = vmatprep.subr.mxu0 0.0
    %1259 = vmatpush2.msra.mxu0 0.0
    %1260 = vmatprep.subr.mxu0 0.0
    %1261 = vmatpush2.msra.mxu0 0.0
    %1262 = vmatprep.subr.mxu0 0.0
    %1263 = vmatpush2.msra.mxu0 0.0
    %1264 = vmatprep.subr.mxu0 0.0
    %1265 = vmatpush2.msra.mxu0 0.0
    %1266 = vmatprep.subr.mxu0 0.0
    %1267 = vmatpush2.msra.mxu0 0.0
    %1268 = vmatprep.mubr.f32.mxu0 0.0
    %1269 = vmatmul.mubr.f32.gmra.mxu0 %v1171
    %v1270 = vpop.f32.mrf.mxu0
    %v1271 = vadd.f32 0.0, %v1270
    %v1272 = vpop.f32.mrf.mxu0
    %1273 = vmatprep.mubr.f32.mxu0 0.0
    %1274 = vmatmul.mubr.f32.gmra.mxu0 %v1172
    %v1275 = vpop.f32.mrf.mxu0
    %v1276 = vadd.f32 0.0, %v1275
    %v1277 = vpop.f32.mrf.mxu0
    %1278 = vmatprep.mubr.f32.mxu0 0.0
    %1279 = vmatmul.mubr.f32.gmra.mxu0 %v1173
    %v1280 = vpop.f32.mrf.mxu0
    %v1281 = vadd.f32 0.0, %v1280
    %v1282 = vpop.f32.mrf.mxu0
    %1283 = vmatprep.mubr.f32.mxu0 0.0
    %1284 = vmatmul.mubr.f32.gmra.mxu0 %v1174
    %v1285 = vpop.f32.mrf.mxu0
    %v1286 = vadd.f32 0.0, %v1285
    %v1287 = vpop.f32.mrf.mxu0
    %1288 = vmatprep.mubr.f32.mxu0 0.0
    %1289 = vmatmul.mubr.f32.gmra.mxu0 %v1175
    %v1290 = vpop.f32.mrf.mxu0
    %v1291 = vadd.f32 0.0, %v1290
    %v1292 = vpop.f32.mrf.mxu0
    %1293 = vmatprep.mubr.f32.mxu0 0.0
    %1294 = vmatmul.mubr.f32.gmra.mxu0 %v1176
    %v1295 = vpop.f32.mrf.mxu0
    %v1296 = vadd.f32 0.0, %v1295
    %v1297 = vpop.f32.mrf.mxu0
    %1298 = vmatprep.mubr.f32.mxu0 0.0
    %1299 = vmatmul.mubr.f32.gmra.mxu0 %v1177
    %v1300 = vpop.f32.mrf.mxu0
    %v1301 = vadd.f32 0.0, %v1300
    %v1302 = vpop.f32.mrf.mxu0
    %1303 = vmatprep.mubr.f32.mxu0 0.0
    %1304 = vmatmul.mubr.f32.gmra.mxu0 %v1178
    %v1305 = vpop.f32.mrf.mxu0
    %v1306 = vadd.f32 0.0, %v1305
    %v1307 = vpop.f32.mrf.mxu0
    %1308 = vmatprep.mubr.f32.mxu0 0.0
    %1309 = vmatmul.mubr.f32.gmra.mxu0 %v1179
    %v1310 = vpop.f32.mrf.mxu0
    %v1311 = vadd.f32 0.0, %v1310
    %v1312 = vpop.f32.mrf.mxu0
    %1313 = vmatprep.mubr.f32.mxu0 0.0
    %1314 = vmatmul.mubr.f32.gmra.mxu0 %v1180
    %v1315 = vpop.f32.mrf.mxu0
    %v1316 = vadd.f32 0.0, %v1315
    %v1317 = vpop.f32.mrf.mxu0
    %1318 = vmatprep.mubr.f32.mxu0 0.0
    %1319 = vmatmul.mubr.f32.gmra.mxu0 %v1181
    %v1320 = vpop.f32.mrf.mxu0
    %v1321 = vadd.f32 0.0, %v1320
    %v1322 = vpop.f32.mrf.mxu0
    %1323 = vmatprep.mubr.f32.mxu0 0.0
    %1324 = vmatmul.mubr.f32.gmra.mxu0 %v1182
    %v1325 = vpop.f32.mrf.mxu0
    %v1326 = vadd.f32 0.0, %v1325
    %v1327 = vpop.f32.mrf.mxu0
    %1328 = vmatprep.mubr.f32.mxu0 0.0
    %1329 = vmatmul.mubr.f32.gmra.mxu0 %v1183
    %v1330 = vpop.f32.mrf.mxu0
    %v1331 = vadd.f32 0.0, %v1330
    %v1332 = vpop.f32.mrf.mxu0
    %1333 = vmatprep.mubr.f32.mxu0 0.0
    %1334 = vmatmul.mubr.f32.gmra.mxu0 %v1184
    %v1335 = vpop.f32.mrf.mxu0
    %v1336 = vadd.f32 0.0, %v1335
    %v1337 = vpop.f32.mrf.mxu0
    %1338 = vmatprep.mubr.f32.mxu0 0.0
    %1339 = vmatmul.mubr.f32.gmra.mxu0 %v1185
    %v1340 = vpop.f32.mrf.mxu0
    %v1341 = vadd.f32 0.0, %v1340
    %v1342 = vpop.f32.mrf.mxu0
    %1343 = vmatprep.mubr.f32.mxu0 0.0
    %1344 = vmatmul.mubr.f32.gmra.mxu0 %v1186
    %v1345 = vpop.f32.mrf.mxu0
    %v1346 = vadd.f32 0.0, %v1345
    %v1347 = vpop.f32.mrf.mxu0
    %1348 = vdwg.mxu0
    %v1349 = vmul.f32 %v704, %v1271
    %v1350 = vmul.f32 %v709, %v1276
    %v1351 = vmul.f32 %v714, %v1281
    %v1352 = vmul.f32 %v719, %v1286
    %v1353 = vmul.f32 %v724, %v1291
    %v1354 = vmul.f32 %v729, %v1296
    %v1355 = vmul.f32 %v734, %v1301
    %v1356 = vmul.f32 %v739, %v1306
    %v1357 = vmul.f32 %v744, %v1311
    %v1358 = vmul.f32 %v749, %v1316
    %v1359 = vmul.f32 %v754, %v1321
    %v1360 = vmul.f32 %v759, %v1326
    %v1361 = vmul.f32 %v764, %v1331
    %v1362 = vmul.f32 %v769, %v1336
    %v1363 = vmul.f32 %v774, %v1341
    %v1364 = vmul.f32 %v779, %v1346
    %s1365 = scalar_lea.vmem [#allocation2], 640
    %v1366 = vld [vmem:[%s1365] sm:$0xff]
    %v1367 = vld [vmem:[%s1365 + $0x8] sm:$0xff]
    %v1368 = vld [vmem:[%s1365 + $0x10] sm:$0xff]
    %v1369 = vld [vmem:[%s1365 + $0x18] sm:$0xff]
    %v1370 = vld [vmem:[%s1365 + $0x20] sm:$0xff]
    %v1371 = vld [vmem:[%s1365 + $0x28] sm:$0xff]
    %v1372 = vld [vmem:[%s1365 + $0x30] sm:$0xff]
    %v1373 = vld [vmem:[%s1365 + $0x38] sm:$0xff]
    %v1374 = vld [vmem:[%s1365 + $0x40] sm:$0xff]
    %v1375 = vld [vmem:[%s1365 + $0x48] sm:$0xff]
    %v1376 = vld [vmem:[%s1365 + $0x50] sm:$0xff]
    %v1377 = vld [vmem:[%s1365 + $0x58] sm:$0xff]
    %v1378 = vld [vmem:[%s1365 + $0x60] sm:$0xff]
    %v1379 = vld [vmem:[%s1365 + $0x68] sm:$0xff]
    %v1380 = vld [vmem:[%s1365 + $0x70] sm:$0xff]
    %v1381 = vld [vmem:[%s1365 + $0x78] sm:$0xff]
    %1382 = vmatprep.subr.mxu0 0.0
    %1383 = vmatpush1.msra.mxu0 %v1381
    %1384 = vmatprep.subr.mxu0 0.0
    %1385 = vmatpush1.msra.mxu0 %v1380
    %1386 = vmatprep.subr.mxu0 0.0
    %1387 = vmatpush1.msra.mxu0 %v1379
    %1388 = vmatprep.subr.mxu0 0.0
    %1389 = vmatpush1.msra.mxu0 %v1378
    %1390 = vmatprep.subr.mxu0 0.0
    %1391 = vmatpush1.msra.mxu0 %v1377
    %1392 = vmatprep.subr.mxu0 0.0
    %1393 = vmatpush1.msra.mxu0 %v1376
    %1394 = vmatprep.subr.mxu0 0.0
    %1395 = vmatpush1.msra.mxu0 %v1375
    %1396 = vmatprep.subr.mxu0 0.0
    %1397 = vmatpush1.msra.mxu0 %v1374
    %1398 = vmatprep.subr.mxu0 0.0
    %1399 = vmatpush1.msra.mxu0 %v1373
    %1400 = vmatprep.subr.mxu0 0.0
    %1401 = vmatpush1.msra.mxu0 %v1372
    %1402 = vmatprep.subr.mxu0 0.0
    %1403 = vmatpush1.msra.mxu0 %v1371
    %1404 = vmatprep.subr.mxu0 0.0
    %1405 = vmatpush1.msra.mxu0 %v1370
    %1406 = vmatprep.subr.mxu0 0.0
    %1407 = vmatpush1.msra.mxu0 %v1369
    %1408 = vmatprep.subr.mxu0 0.0
    %1409 = vmatpush1.msra.mxu0 %v1368
    %1410 = vmatprep.subr.mxu0 0.0
    %1411 = vmatpush1.msra.mxu0 %v1367
    %1412 = vmatprep.subr.mxu0 0.0
    %1413 = vmatpush1.msra.mxu0 %v1366
    %1414 = vmatprep.subr.mxu0 0.0
    %1415 = vmatpush2.msra.mxu0 0.0
    %1416 = vmatprep.subr.mxu0 0.0
    %1417 = vmatpush2.msra.mxu0 0.0
    %1418 = vmatprep.subr.mxu0 0.0
    %1419 = vmatpush2.msra.mxu0 0.0
    %1420 = vmatprep.subr.mxu0 0.0
    %1421 = vmatpush2.msra.mxu0 0.0
    %1422 = vmatprep.subr.mxu0 0.0
    %1423 = vmatpush2.msra.mxu0 0.0
    %1424 = vmatprep.subr.mxu0 0.0
    %1425 = vmatpush2.msra.mxu0 0.0
    %1426 = vmatprep.subr.mxu0 0.0
    %1427 = vmatpush2.msra.mxu0 0.0
    %1428 = vmatprep.subr.mxu0 0.0
    %1429 = vmatpush2.msra.mxu0 0.0
    %1430 = vmatprep.subr.mxu0 0.0
    %1431 = vmatpush2.msra.mxu0 0.0
    %1432 = vmatprep.subr.mxu0 0.0
    %1433 = vmatpush2.msra.mxu0 0.0
    %1434 = vmatprep.subr.mxu0 0.0
    %1435 = vmatpush2.msra.mxu0 0.0
    %1436 = vmatprep.subr.mxu0 0.0
    %1437 = vmatpush2.msra.mxu0 0.0
    %1438 = vmatprep.subr.mxu0 0.0
    %1439 = vmatpush2.msra.mxu0 0.0
    %1440 = vmatprep.subr.mxu0 0.0
    %1441 = vmatpush2.msra.mxu0 0.0
    %1442 = vmatprep.subr.mxu0 0.0
    %1443 = vmatpush2.msra.mxu0 0.0
    %1444 = vmatprep.subr.mxu0 0.0
    %1445 = vmatpush2.msra.mxu0 0.0
    %1446 = vmatprep.mubr.f32.mxu0 0.0
    %1447 = vmatmul.mubr.f32.gmra.mxu0 %v1349
    %v1448 = vpop.f32.mrf.mxu0
    %v1449 = vadd.f32 0.0, %v1448
    %v1450 = vpop.f32.mrf.mxu0
    %1451 = vmatprep.mubr.f32.mxu0 0.0
    %1452 = vmatmul.mubr.f32.gmra.mxu0 %v1350
    %v1453 = vpop.f32.mrf.mxu0
    %v1454 = vadd.f32 0.0, %v1453
    %v1455 = vpop.f32.mrf.mxu0
    %1456 = vmatprep.mubr.f32.mxu0 0.0
    %1457 = vmatmul.mubr.f32.gmra.mxu0 %v1351
    %v1458 = vpop.f32.mrf.mxu0
    %v1459 = vadd.f32 0.0, %v1458
    %v1460 = vpop.f32.mrf.mxu0
    %1461 = vmatprep.mubr.f32.mxu0 0.0
    %1462 = vmatmul.mubr.f32.gmra.mxu0 %v1352
    %v1463 = vpop.f32.mrf.mxu0
    %v1464 = vadd.f32 0.0, %v1463
    %v1465 = vpop.f32.mrf.mxu0
    %1466 = vmatprep.mubr.f32.mxu0 0.0
    %1467 = vmatmul.mubr.f32.gmra.mxu0 %v1353
    %v1468 = vpop.f32.mrf.mxu0
    %v1469 = vadd.f32 0.0, %v1468
    %v1470 = vpop.f32.mrf.mxu0
    %1471 = vmatprep.mubr.f32.mxu0 0.0
    %1472 = vmatmul.mubr.f32.gmra.mxu0 %v1354
    %v1473 = vpop.f32.mrf.mxu0
    %v1474 = vadd.f32 0.0, %v1473
    %v1475 = vpop.f32.mrf.mxu0
    %1476 = vmatprep.mubr.f32.mxu0 0.0
    %1477 = vmatmul.mubr.f32.gmra.mxu0 %v1355
    %v1478 = vpop.f32.mrf.mxu0
    %v1479 = vadd.f32 0.0, %v1478
    %v1480 = vpop.f32.mrf.mxu0
    %1481 = vmatprep.mubr.f32.mxu0 0.0
    %1482 = vmatmul.mubr.f32.gmra.mxu0 %v1356
    %v1483 = vpop.f32.mrf.mxu0
    %v1484 = vadd.f32 0.0, %v1483
    %v1485 = vpop.f32.mrf.mxu0
    %1486 = vmatprep.mubr.f32.mxu0 0.0
    %1487 = vmatmul.mubr.f32.gmra.mxu0 %v1357
    %v1488 = vpop.f32.mrf.mxu0
    %v1489 = vadd.f32 0.0, %v1488
    %v1490 = vpop.f32.mrf.mxu0
    %1491 = vmatprep.mubr.f32.mxu0 0.0
    %1492 = vmatmul.mubr.f32.gmra.mxu0 %v1358
    %v1493 = vpop.f32.mrf.mxu0
    %v1494 = vadd.f32 0.0, %v1493
    %v1495 = vpop.f32.mrf.mxu0
    %1496 = vmatprep.mubr.f32.mxu0 0.0
    %1497 = vmatmul.mubr.f32.gmra.mxu0 %v1359
    %v1498 = vpop.f32.mrf.mxu0
    %v1499 = vadd.f32 0.0, %v1498
    %v1500 = vpop.f32.mrf.mxu0
    %1501 = vmatprep.mubr.f32.mxu0 0.0
    %1502 = vmatmul.mubr.f32.gmra.mxu0 %v1360
    %v1503 = vpop.f32.mrf.mxu0
    %v1504 = vadd.f32 0.0, %v1503
    %v1505 = vpop.f32.mrf.mxu0
    %1506 = vmatprep.mubr.f32.mxu0 0.0
    %1507 = vmatmul.mubr.f32.gmra.mxu0 %v1361
    %v1508 = vpop.f32.mrf.mxu0
    %v1509 = vadd.f32 0.0, %v1508
    %v1510 = vpop.f32.mrf.mxu0
    %1511 = vmatprep.mubr.f32.mxu0 0.0
    %1512 = vmatmul.mubr.f32.gmra.mxu0 %v1362
    %v1513 = vpop.f32.mrf.mxu0
    %v1514 = vadd.f32 0.0, %v1513
    %v1515 = vpop.f32.mrf.mxu0
    %1516 = vmatprep.mubr.f32.mxu0 0.0
    %1517 = vmatmul.mubr.f32.gmra.mxu0 %v1363
    %v1518 = vpop.f32.mrf.mxu0
    %v1519 = vadd.f32 0.0, %v1518
    %v1520 = vpop.f32.mrf.mxu0
    %1521 = vmatprep.mubr.f32.mxu0 0.0
    %1522 = vmatmul.mubr.f32.gmra.mxu0 %v1364
    %v1523 = vpop.f32.mrf.mxu0
    %v1524 = vadd.f32 0.0, %v1523
    %v1525 = vpop.f32.mrf.mxu0
    %1526 = vdwg.mxu0
    %s1527 = scalar_lea.vmem [#allocation2], 768
    %v1528 = vld [vmem:[%s1527] sm:$0xff]
    %v1529 = vld [vmem:[%s1527 + $0x8] sm:$0xff]
    %v1530 = vld [vmem:[%s1527 + $0x10] sm:$0xff]
    %v1531 = vld [vmem:[%s1527 + $0x18] sm:$0xff]
    %v1532 = vld [vmem:[%s1527 + $0x20] sm:$0xff]
    %v1533 = vld [vmem:[%s1527 + $0x28] sm:$0xff]
    %v1534 = vld [vmem:[%s1527 + $0x30] sm:$0xff]
    %v1535 = vld [vmem:[%s1527 + $0x38] sm:$0xff]
    %v1536 = vld [vmem:[%s1527 + $0x40] sm:$0xff]
    %v1537 = vld [vmem:[%s1527 + $0x48] sm:$0xff]
    %v1538 = vld [vmem:[%s1527 + $0x50] sm:$0xff]
    %v1539 = vld [vmem:[%s1527 + $0x58] sm:$0xff]
    %v1540 = vld [vmem:[%s1527 + $0x60] sm:$0xff]
    %v1541 = vld [vmem:[%s1527 + $0x68] sm:$0xff]
    %v1542 = vld [vmem:[%s1527 + $0x70] sm:$0xff]
    %v1543 = vld [vmem:[%s1527 + $0x78] sm:$0xff]
    %1544 = vmatprep.subr.mxu0 0.0
    %1545 = vmatpush1.msra.mxu0 %v1543
    %1546 = vmatprep.subr.mxu0 0.0
    %1547 = vmatpush1.msra.mxu0 %v1542
    %1548 = vmatprep.subr.mxu0 0.0
    %1549 = vmatpush1.msra.mxu0 %v1541
    %1550 = vmatprep.subr.mxu0 0.0
    %1551 = vmatpush1.msra.mxu0 %v1540
    %1552 = vmatprep.subr.mxu0 0.0
    %1553 = vmatpush1.msra.mxu0 %v1539
    %1554 = vmatprep.subr.mxu0 0.0
    %1555 = vmatpush1.msra.mxu0 %v1538
    %1556 = vmatprep.subr.mxu0 0.0
    %1557 = vmatpush1.msra.mxu0 %v1537
    %1558 = vmatprep.subr.mxu0 0.0
    %1559 = vmatpush1.msra.mxu0 %v1536
    %1560 = vmatprep.subr.mxu0 0.0
    %1561 = vmatpush1.msra.mxu0 %v1535
    %1562 = vmatprep.subr.mxu0 0.0
    %1563 = vmatpush1.msra.mxu0 %v1534
    %1564 = vmatprep.subr.mxu0 0.0
    %1565 = vmatpush1.msra.mxu0 %v1533
    %1566 = vmatprep.subr.mxu0 0.0
    %1567 = vmatpush1.msra.mxu0 %v1532
    %1568 = vmatprep.subr.mxu0 0.0
    %1569 = vmatpush1.msra.mxu0 %v1531
    %1570 = vmatprep.subr.mxu0 0.0
    %1571 = vmatpush1.msra.mxu0 %v1530
    %1572 = vmatprep.subr.mxu0 0.0
    %1573 = vmatpush1.msra.mxu0 %v1529
    %1574 = vmatprep.subr.mxu0 0.0
    %1575 = vmatpush1.msra.mxu0 %v1528
    %1576 = vmatprep.subr.mxu0 0.0
    %1577 = vmatpush2.msra.mxu0 0.0
    %1578 = vmatprep.subr.mxu0 0.0
    %1579 = vmatpush2.msra.mxu0 0.0
    %1580 = vmatprep.subr.mxu0 0.0
    %1581 = vmatpush2.msra.mxu0 0.0
    %1582 = vmatprep.subr.mxu0 0.0
    %1583 = vmatpush2.msra.mxu0 0.0
    %1584 = vmatprep.subr.mxu0 0.0
    %1585 = vmatpush2.msra.mxu0 0.0
    %1586 = vmatprep.subr.mxu0 0.0
    %1587 = vmatpush2.msra.mxu0 0.0
    %1588 = vmatprep.subr.mxu0 0.0
    %1589 = vmatpush2.msra.mxu0 0.0
    %1590 = vmatprep.subr.mxu0 0.0
    %1591 = vmatpush2.msra.mxu0 0.0
    %1592 = vmatprep.subr.mxu0 0.0
    %1593 = vmatpush2.msra.mxu0 0.0
    %1594 = vmatprep.subr.mxu0 0.0
    %1595 = vmatpush2.msra.mxu0 0.0
    %1596 = vmatprep.subr.mxu0 0.0
    %1597 = vmatpush2.msra.mxu0 0.0
    %1598 = vmatprep.subr.mxu0 0.0
    %1599 = vmatpush2.msra.mxu0 0.0
    %1600 = vmatprep.subr.mxu0 0.0
    %1601 = vmatpush2.msra.mxu0 0.0
    %1602 = vmatprep.subr.mxu0 0.0
    %1603 = vmatpush2.msra.mxu0 0.0
    %1604 = vmatprep.subr.mxu0 0.0
    %1605 = vmatpush2.msra.mxu0 0.0
    %1606 = vmatprep.subr.mxu0 0.0
    %1607 = vmatpush2.msra.mxu0 0.0
    %1608 = vmatprep.mubr.f32.mxu0 0.0
    %1609 = vmatmul.mubr.f32.gmra.mxu0 %v1449
    %v1610 = vpop.f32.mrf.mxu0
    %v1611 = vadd.f32 0.0, %v1610
    %v1612 = vpop.f32.mrf.mxu0
    %1613 = vmatprep.mubr.f32.mxu0 0.0
    %1614 = vmatmul.mubr.f32.gmra.mxu0 %v1454
    %v1615 = vpop.f32.mrf.mxu0
    %v1616 = vadd.f32 0.0, %v1615
    %v1617 = vpop.f32.mrf.mxu0
    %1618 = vmatprep.mubr.f32.mxu0 0.0
    %1619 = vmatmul.mubr.f32.gmra.mxu0 %v1459
    %v1620 = vpop.f32.mrf.mxu0
    %v1621 = vadd.f32 0.0, %v1620
    %v1622 = vpop.f32.mrf.mxu0
    %1623 = vmatprep.mubr.f32.mxu0 0.0
    %1624 = vmatmul.mubr.f32.gmra.mxu0 %v1464
    %v1625 = vpop.f32.mrf.mxu0
    %v1626 = vadd.f32 0.0, %v1625
    %v1627 = vpop.f32.mrf.mxu0
    %1628 = vmatprep.mubr.f32.mxu0 0.0
    %1629 = vmatmul.mubr.f32.gmra.mxu0 %v1469
    %v1630 = vpop.f32.mrf.mxu0
    %v1631 = vadd.f32 0.0, %v1630
    %v1632 = vpop.f32.mrf.mxu0
    %1633 = vmatprep.mubr.f32.mxu0 0.0
    %1634 = vmatmul.mubr.f32.gmra.mxu0 %v1474
    %v1635 = vpop.f32.mrf.mxu0
    %v1636 = vadd.f32 0.0, %v1635
    %v1637 = vpop.f32.mrf.mxu0
    %1638 = vmatprep.mubr.f32.mxu0 0.0
    %1639 = vmatmul.mubr.f32.gmra.mxu0 %v1479
    %v1640 = vpop.f32.mrf.mxu0
    %v1641 = vadd.f32 0.0, %v1640
    %v1642 = vpop.f32.mrf.mxu0
    %1643 = vmatprep.mubr.f32.mxu0 0.0
    %1644 = vmatmul.mubr.f32.gmra.mxu0 %v1484
    %v1645 = vpop.f32.mrf.mxu0
    %v1646 = vadd.f32 0.0, %v1645
    %v1647 = vpop.f32.mrf.mxu0
    %1648 = vmatprep.mubr.f32.mxu0 0.0
    %1649 = vmatmul.mubr.f32.gmra.mxu0 %v1489
    %v1650 = vpop.f32.mrf.mxu0
    %v1651 = vadd.f32 0.0, %v1650
    %v1652 = vpop.f32.mrf.mxu0
    %1653 = vmatprep.mubr.f32.mxu0 0.0
    %1654 = vmatmul.mubr.f32.gmra.mxu0 %v1494
    %v1655 = vpop.f32.mrf.mxu0
    %v1656 = vadd.f32 0.0, %v1655
    %v1657 = vpop.f32.mrf.mxu0
    %1658 = vmatprep.mubr.f32.mxu0 0.0
    %1659 = vmatmul.mubr.f32.gmra.mxu0 %v1499
    %v1660 = vpop.f32.mrf.mxu0
    %v1661 = vadd.f32 0.0, %v1660
    %v1662 = vpop.f32.mrf.mxu0
    %1663 = vmatprep.mubr.f32.mxu0 0.0
    %1664 = vmatmul.mubr.f32.gmra.mxu0 %v1504
    %v1665 = vpop.f32.mrf.mxu0
    %v1666 = vadd.f32 0.0, %v1665
    %v1667 = vpop.f32.mrf.mxu0
    %1668 = vmatprep.mubr.f32.mxu0 0.0
    %1669 = vmatmul.mubr.f32.gmra.mxu0 %v1509
    %v1670 = vpop.f32.mrf.mxu0
    %v1671 = vadd.f32 0.0, %v1670
    %v1672 = vpop.f32.mrf.mxu0
    %1673 = vmatprep.mubr.f32.mxu0 0.0
    %1674 = vmatmul.mubr.f32.gmra.mxu0 %v1514
    %v1675 = vpop.f32.mrf.mxu0
    %v1676 = vadd.f32 0.0, %v1675
    %v1677 = vpop.f32.mrf.mxu0
    %1678 = vmatprep.mubr.f32.mxu0 0.0
    %1679 = vmatmul.mubr.f32.gmra.mxu0 %v1519
    %v1680 = vpop.f32.mrf.mxu0
    %v1681 = vadd.f32 0.0, %v1680
    %v1682 = vpop.f32.mrf.mxu0
    %1683 = vmatprep.mubr.f32.mxu0 0.0
    %1684 = vmatmul.mubr.f32.gmra.mxu0 %v1524
    %v1685 = vpop.f32.mrf.mxu0
    %v1686 = vadd.f32 0.0, %v1685
    %v1687 = vpop.f32.mrf.mxu0
    %1688 = vdwg.mxu0
    %v1689 = vmul.f32 %v704, %v1611
    %v1690 = vmul.f32 %v709, %v1616
    %v1691 = vmul.f32 %v714, %v1621
    %v1692 = vmul.f32 %v719, %v1626
    %v1693 = vmul.f32 %v724, %v1631
    %v1694 = vmul.f32 %v729, %v1636
    %v1695 = vmul.f32 %v734, %v1641
    %v1696 = vmul.f32 %v739, %v1646
    %v1697 = vmul.f32 %v744, %v1651
    %v1698 = vmul.f32 %v749, %v1656
    %v1699 = vmul.f32 %v754, %v1661
    %v1700 = vmul.f32 %v759, %v1666
    %v1701 = vmul.f32 %v764, %v1671
    %v1702 = vmul.f32 %v769, %v1676
    %v1703 = vmul.f32 %v774, %v1681
    %v1704 = vmul.f32 %v779, %v1686
    %s1705 = scalar_lea.vmem [#allocation2], 896
    %v1706 = vld [vmem:[%s1705] sm:$0xff]
    %v1707 = vld [vmem:[%s1705 + $0x8] sm:$0xff]
    %v1708 = vld [vmem:[%s1705 + $0x10] sm:$0xff]
    %v1709 = vld [vmem:[%s1705 + $0x18] sm:$0xff]
    %v1710 = vld [vmem:[%s1705 + $0x20] sm:$0xff]
    %v1711 = vld [vmem:[%s1705 + $0x28] sm:$0xff]
    %v1712 = vld [vmem:[%s1705 + $0x30] sm:$0xff]
    %v1713 = vld [vmem:[%s1705 + $0x38] sm:$0xff]
    %v1714 = vld [vmem:[%s1705 + $0x40] sm:$0xff]
    %v1715 = vld [vmem:[%s1705 + $0x48] sm:$0xff]
    %v1716 = vld [vmem:[%s1705 + $0x50] sm:$0xff]
    %v1717 = vld [vmem:[%s1705 + $0x58] sm:$0xff]
    %v1718 = vld [vmem:[%s1705 + $0x60] sm:$0xff]
    %v1719 = vld [vmem:[%s1705 + $0x68] sm:$0xff]
    %v1720 = vld [vmem:[%s1705 + $0x70] sm:$0xff]
    %v1721 = vld [vmem:[%s1705 + $0x78] sm:$0xff]
    %1722 = vmatprep.subr.mxu0 0.0
    %1723 = vmatpush1.msra.mxu0 %v1721
    %1724 = vmatprep.subr.mxu0 0.0
    %1725 = vmatpush1.msra.mxu0 %v1720
    %1726 = vmatprep.subr.mxu0 0.0
    %1727 = vmatpush1.msra.mxu0 %v1719
    %1728 = vmatprep.subr.mxu0 0.0
    %1729 = vmatpush1.msra.mxu0 %v1718
    %1730 = vmatprep.subr.mxu0 0.0
    %1731 = vmatpush1.msra.mxu0 %v1717
    %1732 = vmatprep.subr.mxu0 0.0
    %1733 = vmatpush1.msra.mxu0 %v1716
    %1734 = vmatprep.subr.mxu0 0.0
    %1735 = vmatpush1.msra.mxu0 %v1715
    %1736 = vmatprep.subr.mxu0 0.0
    %1737 = vmatpush1.msra.mxu0 %v1714
    %1738 = vmatprep.subr.mxu0 0.0
    %1739 = vmatpush1.msra.mxu0 %v1713
    %1740 = vmatprep.subr.mxu0 0.0
    %1741 = vmatpush1.msra.mxu0 %v1712
    %1742 = vmatprep.subr.mxu0 0.0
    %1743 = vmatpush1.msra.mxu0 %v1711
    %1744 = vmatprep.subr.mxu0 0.0
    %1745 = vmatpush1.msra.mxu0 %v1710
    %1746 = vmatprep.subr.mxu0 0.0
    %1747 = vmatpush1.msra.mxu0 %v1709
    %1748 = vmatprep.subr.mxu0 0.0
    %1749 = vmatpush1.msra.mxu0 %v1708
    %1750 = vmatprep.subr.mxu0 0.0
    %1751 = vmatpush1.msra.mxu0 %v1707
    %1752 = vmatprep.subr.mxu0 0.0
    %1753 = vmatpush1.msra.mxu0 %v1706
    %1754 = vmatprep.subr.mxu0 0.0
    %1755 = vmatpush2.msra.mxu0 0.0
    %1756 = vmatprep.subr.mxu0 0.0
    %1757 = vmatpush2.msra.mxu0 0.0
    %1758 = vmatprep.subr.mxu0 0.0
    %1759 = vmatpush2.msra.mxu0 0.0
    %1760 = vmatprep.subr.mxu0 0.0
    %1761 = vmatpush2.msra.mxu0 0.0
    %1762 = vmatprep.subr.mxu0 0.0
    %1763 = vmatpush2.msra.mxu0 0.0
    %1764 = vmatprep.subr.mxu0 0.0
    %1765 = vmatpush2.msra.mxu0 0.0
    %1766 = vmatprep.subr.mxu0 0.0
    %1767 = vmatpush2.msra.mxu0 0.0
    %1768 = vmatprep.subr.mxu0 0.0
    %1769 = vmatpush2.msra.mxu0 0.0
    %1770 = vmatprep.subr.mxu0 0.0
    %1771 = vmatpush2.msra.mxu0 0.0
    %1772 = vmatprep.subr.mxu0 0.0
    %1773 = vmatpush2.msra.mxu0 0.0
    %1774 = vmatprep.subr.mxu0 0.0
    %1775 = vmatpush2.msra.mxu0 0.0
    %1776 = vmatprep.subr.mxu0 0.0
    %1777 = vmatpush2.msra.mxu0 0.0
    %1778 = vmatprep.subr.mxu0 0.0
    %1779 = vmatpush2.msra.mxu0 0.0
    %1780 = vmatprep.subr.mxu0 0.0
    %1781 = vmatpush2.msra.mxu0 0.0
    %1782 = vmatprep.subr.mxu0 0.0
    %1783 = vmatpush2.msra.mxu0 0.0
    %1784 = vmatprep.subr.mxu0 0.0
    %1785 = vmatpush2.msra.mxu0 0.0
    %1786 = vmatprep.mubr.f32.mxu0 0.0
    %1787 = vmatmul.mubr.f32.gmra.mxu0 %v1689
    %v1788 = vpop.f32.mrf.mxu0
    %v1789 = vadd.f32 0.0, %v1788
    %v1790 = vpop.f32.mrf.mxu0
    %1791 = vmatprep.mubr.f32.mxu0 0.0
    %1792 = vmatmul.mubr.f32.gmra.mxu0 %v1690
    %v1793 = vpop.f32.mrf.mxu0
    %v1794 = vadd.f32 0.0, %v1793
    %v1795 = vpop.f32.mrf.mxu0
    %1796 = vmatprep.mubr.f32.mxu0 0.0
    %1797 = vmatmul.mubr.f32.gmra.mxu0 %v1691
    %v1798 = vpop.f32.mrf.mxu0
    %v1799 = vadd.f32 0.0, %v1798
    %v1800 = vpop.f32.mrf.mxu0
    %1801 = vmatprep.mubr.f32.mxu0 0.0
    %1802 = vmatmul.mubr.f32.gmra.mxu0 %v1692
    %v1803 = vpop.f32.mrf.mxu0
    %v1804 = vadd.f32 0.0, %v1803
    %v1805 = vpop.f32.mrf.mxu0
    %1806 = vmatprep.mubr.f32.mxu0 0.0
    %1807 = vmatmul.mubr.f32.gmra.mxu0 %v1693
    %v1808 = vpop.f32.mrf.mxu0
    %v1809 = vadd.f32 0.0, %v1808
    %v1810 = vpop.f32.mrf.mxu0
    %1811 = vmatprep.mubr.f32.mxu0 0.0
    %1812 = vmatmul.mubr.f32.gmra.mxu0 %v1694
    %v1813 = vpop.f32.mrf.mxu0
    %v1814 = vadd.f32 0.0, %v1813
    %v1815 = vpop.f32.mrf.mxu0
    %1816 = vmatprep.mubr.f32.mxu0 0.0
    %1817 = vmatmul.mubr.f32.gmra.mxu0 %v1695
    %v1818 = vpop.f32.mrf.mxu0
    %v1819 = vadd.f32 0.0, %v1818
    %v1820 = vpop.f32.mrf.mxu0
    %1821 = vmatprep.mubr.f32.mxu0 0.0
    %1822 = vmatmul.mubr.f32.gmra.mxu0 %v1696
    %v1823 = vpop.f32.mrf.mxu0
    %v1824 = vadd.f32 0.0, %v1823
    %v1825 = vpop.f32.mrf.mxu0
    %1826 = vmatprep.mubr.f32.mxu0 0.0
    %1827 = vmatmul.mubr.f32.gmra.mxu0 %v1697
    %v1828 = vpop.f32.mrf.mxu0
    %v1829 = vadd.f32 0.0, %v1828
    %v1830 = vpop.f32.mrf.mxu0
    %1831 = vmatprep.mubr.f32.mxu0 0.0
    %1832 = vmatmul.mubr.f32.gmra.mxu0 %v1698
    %v1833 = vpop.f32.mrf.mxu0
    %v1834 = vadd.f32 0.0, %v1833
    %v1835 = vpop.f32.mrf.mxu0
    %1836 = vmatprep.mubr.f32.mxu0 0.0
    %1837 = vmatmul.mubr.f32.gmra.mxu0 %v1699
    %v1838 = vpop.f32.mrf.mxu0
    %v1839 = vadd.f32 0.0, %v1838
    %v1840 = vpop.f32.mrf.mxu0
    %1841 = vmatprep.mubr.f32.mxu0 0.0
    %1842 = vmatmul.mubr.f32.gmra.mxu0 %v1700
    %v1843 = vpop.f32.mrf.mxu0
    %v1844 = vadd.f32 0.0, %v1843
    %v1845 = vpop.f32.mrf.mxu0
    %1846 = vmatprep.mubr.f32.mxu0 0.0
    %1847 = vmatmul.mubr.f32.gmra.mxu0 %v1701
    %v1848 = vpop.f32.mrf.mxu0
    %v1849 = vadd.f32 0.0, %v1848
    %v1850 = vpop.f32.mrf.mxu0
    %1851 = vmatprep.mubr.f32.mxu0 0.0
    %1852 = vmatmul.mubr.f32.gmra.mxu0 %v1702
    %v1853 = vpop.f32.mrf.mxu0
    %v1854 = vadd.f32 0.0, %v1853
    %v1855 = vpop.f32.mrf.mxu0
    %1856 = vmatprep.mubr.f32.mxu0 0.0
    %1857 = vmatmul.mubr.f32.gmra.mxu0 %v1703
    %v1858 = vpop.f32.mrf.mxu0
    %v1859 = vadd.f32 0.0, %v1858
    %v1860 = vpop.f32.mrf.mxu0
    %1861 = vmatprep.mubr.f32.mxu0 0.0
    %1862 = vmatmul.mubr.f32.gmra.mxu0 %v1704
    %v1863 = vpop.f32.mrf.mxu0
    %v1864 = vadd.f32 0.0, %v1863
    %v1865 = vpop.f32.mrf.mxu0
    %1866 = vdwg.mxu0
    %1867 = vst [vmem:[#allocation5] sm:$0xff] %v1789
    %1868 = vst [vmem:[#allocation5 + $0x8] sm:$0xff] %v1794
    %1869 = vst [vmem:[#allocation5 + $0x10] sm:$0xff] %v1799
    %1870 = vst [vmem:[#allocation5 + $0x18] sm:$0xff] %v1804
    %1871 = vst [vmem:[#allocation5 + $0x20] sm:$0xff] %v1809
    %1872 = vst [vmem:[#allocation5 + $0x28] sm:$0xff] %v1814
    %1873 = vst [vmem:[#allocation5 + $0x30] sm:$0xff] %v1819
    %1874 = vst [vmem:[#allocation5 + $0x38] sm:$0xff] %v1824
    %1875 = vst [vmem:[#allocation5 + $0x40] sm:$0xff] %v1829
    %1876 = vst [vmem:[#allocation5 + $0x48] sm:$0xff] %v1834
    %1877 = vst [vmem:[#allocation5 + $0x50] sm:$0xff] %v1839
    %1878 = vst [vmem:[#allocation5 + $0x58] sm:$0xff] %v1844
    %1879 = vst [vmem:[#allocation5 + $0x60] sm:$0xff] %v1849
    %1880 = vst [vmem:[#allocation5 + $0x68] sm:$0xff] %v1854
    %1881 = vst [vmem:[#allocation5 + $0x70] sm:$0xff] %v1859
    %1882 = vst [vmem:[#allocation5 + $0x78] sm:$0xff] %v1864
    // Predicated region
    $region26: #{tpu_custom_call.1} parent=1 // pred_check
      _
    $region27: #{tpu_custom_call.1} parent=1 // pred_check_branch
      %1884 = sbr.rel (0) target = $region29
    $region28: #{tpu_custom_call.1} parent=1 // pred_region
      %s1886 = ssub.s32 2048, 2048
      %1887 = vsyncadd [#allocation4], %s1886
      %s1888 = sshll.u32 [#allocation5], 4
      %s1889 = int_to_ptr.vmem [resolvable:$true] %s1888
      %1894 = dma.vmem_to_hbm [thread:$0]  %s1889, 2048, %s5, [#allocation4], 128, 128, 8
    $region29: #{tpu_custom_call.1} parent=1 // pred_fallthru
      _
    // Predicated region
    $region30: #{tpu_custom_call.1} parent=1 // pred_check
      _
    $region31: #{tpu_custom_call.1} parent=1 // pred_check_branch
      %1896 = sbr.rel (0) target = $region33
    $region32: #{tpu_custom_call.1} parent=1 // pred_region
      %1897 = dma.done [#allocation4], 2048
    $region33: #{tpu_custom_call.1} parent=1 // pred_fallthru
      _
    %1898 = vsyncpa [#allocation3], 1
    %1899 = vsyncpa [#allocation4], 1

</llo_original>
